<compile_context>
chip_gen: v5e
topology: v5e:2x2
jax: 0.10.0
libtpu: 0.0.40
codegen_flags: <defaults>
</compile_context>

<pallas_src>
import functools

import jax
import jax.numpy as jnp
from jax.experimental import pallas as pl
from jax.experimental.pallas import tpu as pltpu


# ----------------------------- Pallas kernel -----------------------------

def _convgru_cell_kernel(x_ref, h_ref, w_ref, wo_ref, b_ref, out_ref,
                         pxh_ref, ph_ref, *, K, H, W, Cin, Ch):
    """One ConvGRU cell step for a single batch element (lane-dense slabs).

    x_ref:  (1, H, W*Cin) f32            h_ref: (1, H, W*Ch) f32
    w_ref:  (K, W*(Ch+Cin), 3*W*Ch) bf16 fused banded weights over [h | x],
                                         outputs ordered [reset|update|out]
                                         (h->out block is zero)
    wo_ref: (K, W*Ch, W*Ch) bf16         banded (h*reset)->out weights
    b_ref:  (1, 3*W*Ch) f32              biases tiled over W, [reset|update|out]
    out_ref:(1, H, W*Ch)
    pxh_ref:(H+2P, W*(Ch+Cin)) f32 scratch (H-halo padded [h | x] slab)
    ph_ref: (H+2P, W*Ch)       f32 scratch (H-halo padded h*reset slab)
    """
    P = K // 2
    WC = W * Ch

    # Zero only the tiny H-halo rows each step (cheap; always valid, also
    # under megacore batch sharding), then write the interior rows in place.
    if P > 0:
        pxh_ref[pl.ds(0, P), :] = jnp.zeros((P, pxh_ref.shape[1]), jnp.float32)
        pxh_ref[pl.ds(H + P, P), :] = jnp.zeros((P, pxh_ref.shape[1]),
                                                jnp.float32)
        ph_ref[pl.ds(0, P), :] = jnp.zeros((P, WC), jnp.float32)
        ph_ref[pl.ds(H + P, P), :] = jnp.zeros((P, WC), jnp.float32)

    h = h_ref[0]                                  # (H, W*Ch) f32 gate math
    pxh_ref[pl.ds(P, H), :WC] = h                 # lane-tile-0 aligned block
    pxh_ref[pl.ds(P, H), WC:] = x_ref[0]          # x block (128-aligned start)

    def band_conv(pad_ref, w3_ref, acc):
        # K row-shifted lane-dense matmuls; W taps and channels are folded
        # into the contraction by the banded weights (no per-tap relayout).
        pad = pad_ref[...].astype(jnp.bfloat16)   # cast once per conv group
        for dy in range(K):
            acc = acc + jnp.dot(pad[dy:dy + H, :], w3_ref[dy],
                                preferred_element_type=jnp.float32)
        return acc

    # Fused conv over [h | x] for all three gates; bias pre-loaded into acc.
    g = band_conv(pxh_ref, w_ref,
                  jnp.broadcast_to(b_ref[...], (H, 3 * WC)))

    reset = jax.nn.sigmoid(g[:, 0:WC])
    update = jax.nn.sigmoid(g[:, WC:2 * WC])

    # (h * reset) -> out-gate hidden path (halo rows stay zero).
    ph_ref[pl.ds(P, H), :] = h * reset
    go = band_conv(ph_ref, wo_ref, jnp.zeros((H, WC), jnp.float32))
    out_g = jnp.tanh(g[:, 2 * WC:3 * WC] + go)

    new_h = h * (1.0 - update) + out_g * update
    out_ref[0] = new_h.astype(out_ref.dtype)


# --------------------------- wrapper / weights ---------------------------

def _band_weights(w, W, P):
    """HWIO conv weights (K, K, C, O) -> banded matrices (K, W*C, W*O).

    band[dy, jw*C + c, j*O + o] = w[dy, jw - j + P, c, o]   (0 elsewhere)
    so a KxK 'SAME' conv over a lane-dense (H, W*C) slab becomes K row-shifted
    matmuls; W zero padding is exact because out-of-range taps get 0 rows.
    """
    K, _, C, O = w.shape
    jw = jnp.arange(W)[:, None, None]
    dx = jnp.arange(K)[None, :, None]
    j = jnp.arange(W)[None, None, :]
    sel = (jw == j + dx - P).astype(w.dtype)               # (W, K, W)
    band = jnp.einsum("wxj,yxco->ywcjo", sel, w)           # (K, W, C, W, O)
    return band.reshape(K, W * C, W * O)


def prepare_layer_params(params, W):
    """One-time transform of raw HWIO ConvGRU weights into kernel operands."""
    wr, wu, wo = params["wr"], params["wu"], params["wo"]
    K = wr.shape[0]
    assert K % 2 == 1, "kernel assumes odd kernel sizes (SAME padding)"
    Ch = params["br"].shape[0]
    Cin = wr.shape[2] - Ch
    P = K // 2

    def split(w):
        return w[:, :, :Cin, :], w[:, :, Cin:, :]

    wrx, wrh = split(wr)
    wux, wuh = split(wu)
    wox, woh = split(wo)

    # x-path bands for [reset | update | out]
    x_band = jnp.concatenate(
        [_band_weights(wrx, W, P), _band_weights(wux, W, P),
         _band_weights(wox, W, P)], axis=-1)                # (K, W*Cin, 3*W*Ch)
    # h-path bands for [reset | update | 0 (out handled by h*reset path)]
    h_band = jnp.concatenate(
        [_band_weights(wrh, W, P), _band_weights(wuh, W, P),
         jnp.zeros((K, W * Ch, W * Ch), wrh.dtype)], axis=-1)  # (K, W*Ch, 3WC)
    # Contraction ordered [h | x] so the 128-lane-aligned hidden block lands on
    # lane-tile 0 of the in-kernel scratch (unmasked stores at test sizes).
    w_fused = jnp.concatenate([h_band, x_band], axis=1).astype(jnp.bfloat16)
    wo_band = _band_weights(woh, W, P).astype(jnp.bfloat16)

    bias = jnp.concatenate(
        [jnp.tile(params["br"], W), jnp.tile(params["bu"], W),
         jnp.tile(params["bo"], W)]).reshape(1, 3 * W * Ch).astype(jnp.float32)

    return dict(w_fused=w_fused, wo_band=wo_band, bias=bias,
                K=K, Cin=Cin, Ch=Ch)


def convgru_cell(x_slab, h_slab, prep, H, W):
    """x_slab: (B, H, W*Cin), h_slab: (B, H, W*Ch) -> new hidden (B, H, W*Ch)."""
    B = x_slab.shape[0]
    Cin, Ch, K = prep["Cin"], prep["Ch"], prep["K"]
    P = K // 2
    WC = W * Ch

    def full_spec(shape):
        return pl.BlockSpec(shape, lambda b, _n=len(shape): (0,) * _n)

    kernel = functools.partial(_convgru_cell_kernel,
                               K=K, H=H, W=W, Cin=Cin, Ch=Ch)

    return pl.pallas_call(
        kernel,
        out_shape=jax.ShapeDtypeStruct((B, H, WC), jnp.float32),
        grid_spec=pltpu.PrefetchScalarGridSpec(
            num_scalar_prefetch=0,
            grid=(B,),
            in_specs=[
                pl.BlockSpec((1, H, W * Cin), lambda b: (b, 0, 0)),
                pl.BlockSpec((1, H, WC), lambda b: (b, 0, 0)),
                full_spec(prep["w_fused"].shape),
                full_spec(prep["wo_band"].shape),
                full_spec(prep["bias"].shape),
            ],
            out_specs=pl.BlockSpec((1, H, WC), lambda b: (b, 0, 0)),
            scratch_shapes=[
                pltpu.VMEM((H + 2 * P, W * (Ch + Cin)), jnp.float32),
                pltpu.VMEM((H + 2 * P, WC), jnp.float32),
            ],
        ),
        compiler_params=pltpu.CompilerParams(
            dimension_semantics=("parallel",)),   # batch across v7x's 2 TCs
    )(x_slab, h_slab, prep["w_fused"], prep["wo_band"], prep["bias"])


def convgru_module_forward(x, layer_params):
    """Mirrors ConvGRUModule.forward.  x: (B, H, W, Cin) NHWC.
    Returns the list of per-layer hidden states as (B, H, W, Ch) arrays."""
    B, H, W, _ = x.shape
    input_slab = x.reshape(B, H, -1)      # lane-dense (B, H, W*C) slab (free)
    cell_hidden = None
    upd_hidden = []
    for params in layer_params:
        prep = prepare_layer_params(params, W)  # one-time weight transform
        ch = prep["Ch"]
        if cell_hidden is None:
            cell_hidden = jnp.zeros((B, H, W * ch), jnp.float32)
        new_h = convgru_cell(input_slab, cell_hidden, prep, H, W)
        upd_hidden.append(new_h.reshape(B, H, W, ch))
        input_slab = new_h
        cell_hidden = new_h
    return upd_hidden


def init_params(key, input_size, hidden_sizes, kernel_sizes, n_layers):
    # deterministic synthetic init (PyTorch uses orthogonal_ weights, zero bias)
    # TODO(synk): orthogonal init replaced by scaled normal; small nonzero
    # biases are used here purely to exercise the fused-bias path numerically.
    if not isinstance(hidden_sizes, (list, tuple)):
        hidden_sizes = [hidden_sizes] * n_layers
    if not isinstance(kernel_sizes, (list, tuple)):
        kernel_sizes = [kernel_sizes] * n_layers
    params = []
    for i in range(n_layers):
        cin = input_size if i == 0 else hidden_sizes[i - 1]
        ch = hidden_sizes[i]
        k = kernel_sizes[i]
        key, k1, k2, k3, k4, k5, k6 = jax.random.split(key, 7)
        scale = 0.1
        params.append(dict(
            wr=scale * jax.random.normal(k1, (k, k, cin + ch, ch), jnp.float32),
            wu=scale * jax.random.normal(k2, (k, k, cin + ch, ch), jnp.float32),
            wo=scale * jax.random.normal(k3, (k, k, cin + ch, ch), jnp.float32),
            br=0.05 * jax.random.normal(k4, (ch,), jnp.float32),
            bu=0.05 * jax.random.normal(k5, (ch,), jnp.float32),
            bo=0.05 * jax.random.normal(k6, (ch,), jnp.float32),
        ))
    return params


# ------------------- pure-JAX reference (numerical check) -------------------
def _ref_cell(x, h, params, *, mxu_dtype=None):
    # mxu_dtype=jnp.bfloat16 mirrors the kernel's precision choice (bf16 MXU
    # inputs, f32 accumulation); None gives the exact f32 module semantics.
    def rnd(t):
        return t.astype(mxu_dtype).astype(jnp.float32) if mxu_dtype else t

    def conv(inp, w, b):
        y = jax.lax.conv_general_dilated(
            rnd(inp), rnd(w), window_strides=(1, 1), padding="SAME",
            dimension_numbers=("NHWC", "HWIO", "NHWC"),
            precision=jax.lax.Precision.HIGHEST)
        return y + b

    stacked = jnp.concatenate([x, h], axis=-1)
    reset = jax.nn.sigmoid(conv(stacked, params["wr"], params["br"]))
    update = jax.nn.sigmoid(conv(stacked, params["wu"], params["bu"]))
    stacked2 = jnp.concatenate([x, h * reset], axis=-1)
    out = jnp.tanh(conv(stacked2, params["wo"], params["bo"]))
    return h * (1.0 - update) + out * update


if __name__ == "__main__":
    B, H, W = 2, 16, 16
    input_size, hidden_size, kernel_size, n_layers = 4, 8, 3, 2

    key = jax.random.PRNGKey(0)
    kx, kp = jax.random.split(key)
    x = jax.random.normal(kx, (B, H, W, input_size), jnp.float32)
    params = init_params(kp, input_size, hidden_size, kernel_size, n_layers)

    outs = convgru_module_forward(x, params)
    outs = jax.block_until_ready(outs)

    def run_ref(mxu_dtype):
        inp, hid, refs = x, None, []
        for p in params:
            if hid is None:
                hid = jnp.zeros((B, H, W, p["br"].shape[0]), jnp.float32)
            hid = _ref_cell(inp, hid, p, mxu_dtype=mxu_dtype)
            refs.append(hid)
            inp = hid
        return refs

    # tight check vs a reference that mirrors the kernel's bf16-into-MXU choice
    for o, r in zip(outs, run_ref(jnp.bfloat16)):
        err = float(jnp.max(jnp.abs(o - r)))
        assert err < 5e-3, f"max abs err vs bf16-faithful reference: {err}"
    # loose sanity bound vs the pure-f32 module semantics (bf16 weight rounding)
    for o, r in zip(outs, run_ref(None)):
        err = float(jnp.max(jnp.abs(o - r)))
        assert err < 2e-1, f"max abs err vs f32 reference: {err}"

    print("KERNEL_OK")
</pallas_src>

<mosaic_0001>
module attributes {stable_mosaic.version = 11 : i64} {
  func.func @_convgru_cell_kernel(%arg0: i32, %arg1: memref<1x16x64xf32, #tpu.memory_space<vmem>>, %arg2: memref<1x16x128xf32, #tpu.memory_space<vmem>>, %arg3: memref<3x192x384xbf16, #tpu.memory_space<vmem>>, %arg4: memref<3x128x128xbf16, #tpu.memory_space<vmem>>, %arg5: memref<1x384xf32, #tpu.memory_space<vmem>>, %arg6: memref<1x16x128xf32, #tpu.memory_space<vmem>>, %arg7: memref<18x192xf32, #tpu.memory_space<vmem>>, %arg8: memref<18x128xf32, #tpu.memory_space<vmem>>) attributes {dimension_semantics = [#tpu.dimension_semantics<parallel>], iteration_bounds = array<i64: 2>, scalar_prefetch = 0 : i64, scratch_operands = 2 : i64, tpu.core_type = #tpu.core_type<tc>, window_params = [{transform_indices = @transform_0, window_bounds = array<i64: 1, 16, 64>}, {transform_indices = @transform_1, window_bounds = array<i64: 1, 16, 128>}, {pipeline_mode = #tpu.pipeline_mode<synchronous>, transform_indices = @transform_2, window_bounds = array<i64: 3, 192, 384>}, {pipeline_mode = #tpu.pipeline_mode<synchronous>, transform_indices = @transform_3, window_bounds = array<i64: 3, 128, 128>}, {pipeline_mode = #tpu.pipeline_mode<synchronous>, transform_indices = @transform_4, window_bounds = array<i64: 1, 384>}, {transform_indices = @transform_5, window_bounds = array<i64: 1, 16, 128>}]} {
    %cst = arith.constant 0.000000e+00 : f32
    %0 = vector.broadcast %cst : f32 to vector<1x192xf32>
    %c0 = arith.constant 0 : index
    %c0_0 = arith.constant 0 : index
    %1 = vector.load %arg7[%c0, %c0_0] : memref<18x192xf32, #tpu.memory_space<vmem>>, vector<1x192xf32>
    tpu.vector_store %arg7[%c0, %c0_0], %0 {strides = array<i32>} : memref<18x192xf32, #tpu.memory_space<vmem>>, vector<1x192xf32>,
    %cst_1 = arith.constant 0.000000e+00 : f32
    %2 = vector.broadcast %cst_1 : f32 to vector<1x192xf32>
    %c17 = arith.constant 17 : index
    %c0_2 = arith.constant 0 : index
    %3 = vector.load %arg7[%c17, %c0_2] : memref<18x192xf32, #tpu.memory_space<vmem>>, vector<1x192xf32>
    tpu.vector_store %arg7[%c17, %c0_2], %2 {strides = array<i32>} : memref<18x192xf32, #tpu.memory_space<vmem>>, vector<1x192xf32>,
    %cst_3 = arith.constant 0.000000e+00 : f32
    %4 = vector.broadcast %cst_3 : f32 to vector<1x128xf32>
    %c0_4 = arith.constant 0 : index
    %c0_5 = arith.constant 0 : index
    %5 = vector.load %arg8[%c0_4, %c0_5] : memref<18x128xf32, #tpu.memory_space<vmem>>, vector<1x128xf32>
    tpu.vector_store %arg8[%c0_4, %c0_5], %4 {strides = array<i32>} : memref<18x128xf32, #tpu.memory_space<vmem>>, vector<1x128xf32>,
    %cst_6 = arith.constant 0.000000e+00 : f32
    %6 = vector.broadcast %cst_6 : f32 to vector<1x128xf32>
    %c17_7 = arith.constant 17 : index
    %c0_8 = arith.constant 0 : index
    %7 = vector.load %arg8[%c17_7, %c0_8] : memref<18x128xf32, #tpu.memory_space<vmem>>, vector<1x128xf32>
    tpu.vector_store %arg8[%c17_7, %c0_8], %6 {strides = array<i32>} : memref<18x128xf32, #tpu.memory_space<vmem>>, vector<1x128xf32>,
    %c0_9 = arith.constant 0 : index
    %c0_10 = arith.constant 0 : index
    %c0_11 = arith.constant 0 : index
    %8 = vector.load %arg2[%c0_9, %c0_10, %c0_11] : memref<1x16x128xf32, #tpu.memory_space<vmem>>, vector<1x16x128xf32>
    %9 = vector.shape_cast %8 : vector<1x16x128xf32> to vector<16x128xf32>
    %c1 = arith.constant 1 : index
    %c0_12 = arith.constant 0 : index
    %10 = vector.load %arg7[%c1, %c0_12] : memref<18x192xf32, #tpu.memory_space<vmem>>, vector<16x128xf32>
    tpu.vector_store %arg7[%c1, %c0_12], %9 {strides = array<i32>} : memref<18x192xf32, #tpu.memory_space<vmem>>, vector<16x128xf32>,
    %c0_13 = arith.constant 0 : index
    %c0_14 = arith.constant 0 : index
    %c0_15 = arith.constant 0 : index
    %11 = vector.load %arg1[%c0_13, %c0_14, %c0_15] : memref<1x16x64xf32, #tpu.memory_space<vmem>>, vector<1x16x64xf32>
    %12 = vector.shape_cast %11 : vector<1x16x64xf32> to vector<16x64xf32>
    %c1_16 = arith.constant 1 : index
    %c128 = arith.constant 128 : index
    %13 = vector.load %arg7[%c1_16, %c128] : memref<18x192xf32, #tpu.memory_space<vmem>>, vector<16x64xf32>
    tpu.vector_store %arg7[%c1_16, %c128], %12 {strides = array<i32>} : memref<18x192xf32, #tpu.memory_space<vmem>>, vector<16x64xf32>,
    %c0_17 = arith.constant 0 : index
    %c0_18 = arith.constant 0 : index
    %14 = vector.load %arg5[%c0_17, %c0_18] : memref<1x384xf32, #tpu.memory_space<vmem>>, vector<1x384xf32>
    %15 = vector.shape_cast %14 : vector<1x384xf32> to vector<1x384xf32>
    %16 = vector.broadcast %15 : vector<1x384xf32> to vector<16x384xf32>
    %c0_19 = arith.constant 0 : index
    %c0_20 = arith.constant 0 : index
    %17 = vector.load %arg7[%c0_19, %c0_20] : memref<18x192xf32, #tpu.memory_space<vmem>>, vector<18x192xf32>
    %18 = arith.truncf %17 : vector<18x192xf32> to vector<18x192xbf16>
    %19 = vector.extract_strided_slice %18 {offsets = [0, 0], sizes = [16, 192], strides = [1, 1]} : vector<18x192xbf16> to vector<16x192xbf16>
    %c0_21 = arith.constant 0 : index
    %c0_22 = arith.constant 0 : index
    %c0_23 = arith.constant 0 : index
    %20 = vector.load %arg3[%c0_21, %c0_22, %c0_23] : memref<3x192x384xbf16, #tpu.memory_space<vmem>>, vector<1x192x384xbf16>
    %21 = vector.shape_cast %20 : vector<1x192x384xbf16> to vector<192x384xbf16>
    %cst_24 = arith.constant dense<0.000000e+00> : vector<16x384xf32>
    %22 = tpu.matmul %19, %21, %cst_24 {dimension_numbers = #tpu.dot_dimension_numbers<[1], [0], [0], [1], [0, 0, 1, 1], [], []>} : vector<16x192xbf16>, vector<192x384xbf16>, vector<16x384xf32> -> vector<16x384xf32>
    %23 = arith.addf %16, %22 : vector<16x384xf32>
    %24 = vector.extract_strided_slice %18 {offsets = [1, 0], sizes = [16, 192], strides = [1, 1]} : vector<18x192xbf16> to vector<16x192xbf16>
    %c1_25 = arith.constant 1 : index
    %c0_26 = arith.constant 0 : index
    %c0_27 = arith.constant 0 : index
    %25 = vector.load %arg3[%c1_25, %c0_26, %c0_27] : memref<3x192x384xbf16, #tpu.memory_space<vmem>>, vector<1x192x384xbf16>
    %26 = vector.shape_cast %25 : vector<1x192x384xbf16> to vector<192x384xbf16>
    %cst_28 = arith.constant dense<0.000000e+00> : vector<16x384xf32>
    %27 = tpu.matmul %24, %26, %cst_28 {dimension_numbers = #tpu.dot_dimension_numbers<[1], [0], [0], [1], [0, 0, 1, 1], [], []>} : vector<16x192xbf16>, vector<192x384xbf16>, vector<16x384xf32> -> vector<16x384xf32>
    %28 = arith.addf %23, %27 : vector<16x384xf32>
    %29 = vector.extract_strided_slice %18 {offsets = [2, 0], sizes = [16, 192], strides = [1, 1]} : vector<18x192xbf16> to vector<16x192xbf16>
    %c2 = arith.constant 2 : index
    %c0_29 = arith.constant 0 : index
    %c0_30 = arith.constant 0 : index
    %30 = vector.load %arg3[%c2, %c0_29, %c0_30] : memref<3x192x384xbf16, #tpu.memory_space<vmem>>, vector<1x192x384xbf16>
    %31 = vector.shape_cast %30 : vector<1x192x384xbf16> to vector<192x384xbf16>
    %cst_31 = arith.constant dense<0.000000e+00> : vector<16x384xf32>
    %32 = tpu.matmul %29, %31, %cst_31 {dimension_numbers = #tpu.dot_dimension_numbers<[1], [0], [0], [1], [0, 0, 1, 1], [], []>} : vector<16x192xbf16>, vector<192x384xbf16>, vector<16x384xf32> -> vector<16x384xf32>
    %33 = arith.addf %28, %32 : vector<16x384xf32>
    %34 = vector.extract_strided_slice %33 {offsets = [0, 0], sizes = [16, 128], strides = [1, 1]} : vector<16x384xf32> to vector<16x128xf32>
    %35 = arith.negf %34 : vector<16x128xf32>
    %36 = math.exp %35 : vector<16x128xf32>
    %cst_32 = arith.constant 1.000000e+00 : f32
    %37 = vector.broadcast %cst_32 : f32 to vector<16x128xf32>
    %38 = arith.addf %37, %36 : vector<16x128xf32>
    %39 = arith.divf %37, %38 : vector<16x128xf32>
    %40 = vector.extract_strided_slice %33 {offsets = [0, 128], sizes = [16, 128], strides = [1, 1]} : vector<16x384xf32> to vector<16x128xf32>
    %41 = arith.negf %40 : vector<16x128xf32>
    %42 = math.exp %41 : vector<16x128xf32>
    %cst_33 = arith.constant 1.000000e+00 : f32
    %43 = vector.broadcast %cst_33 : f32 to vector<16x128xf32>
    %44 = arith.addf %43, %42 : vector<16x128xf32>
    %45 = arith.divf %43, %44 : vector<16x128xf32>
    %46 = arith.mulf %9, %39 : vector<16x128xf32>
    %c1_34 = arith.constant 1 : index
    %c0_35 = arith.constant 0 : index
    %47 = vector.load %arg8[%c1_34, %c0_35] : memref<18x128xf32, #tpu.memory_space<vmem>>, vector<16x128xf32>
    tpu.vector_store %arg8[%c1_34, %c0_35], %46 {strides = array<i32>} : memref<18x128xf32, #tpu.memory_space<vmem>>, vector<16x128xf32>,
    %cst_36 = arith.constant 0.000000e+00 : f32
    %48 = vector.broadcast %cst_36 : f32 to vector<16x128xf32>
    %c0_37 = arith.constant 0 : index
    %c0_38 = arith.constant 0 : index
    %49 = vector.load %arg8[%c0_37, %c0_38] : memref<18x128xf32, #tpu.memory_space<vmem>>, vector<18x128xf32>
    %50 = arith.truncf %49 : vector<18x128xf32> to vector<18x128xbf16>
    %51 = vector.extract_strided_slice %50 {offsets = [0, 0], sizes = [16, 128], strides = [1, 1]} : vector<18x128xbf16> to vector<16x128xbf16>
    %c0_39 = arith.constant 0 : index
    %c0_40 = arith.constant 0 : index
    %c0_41 = arith.constant 0 : index
    %52 = vector.load %arg4[%c0_39, %c0_40, %c0_41] : memref<3x128x128xbf16, #tpu.memory_space<vmem>>, vector<1x128x128xbf16>
    %53 = vector.shape_cast %52 : vector<1x128x128xbf16> to vector<128x128xbf16>
    %cst_42 = arith.constant dense<0.000000e+00> : vector<16x128xf32>
    %54 = tpu.matmul %51, %53, %cst_42 {dimension_numbers = #tpu.dot_dimension_numbers<[1], [0], [0], [1], [0, 0, 1, 1], [], []>} : vector<16x128xbf16>, vector<128x128xbf16>, vector<16x128xf32> -> vector<16x128xf32>
    %55 = arith.addf %48, %54 : vector<16x128xf32>
    %56 = vector.extract_strided_slice %50 {offsets = [1, 0], sizes = [16, 128], strides = [1, 1]} : vector<18x128xbf16> to vector<16x128xbf16>
    %c1_43 = arith.constant 1 : index
    %c0_44 = arith.constant 0 : index
    %c0_45 = arith.constant 0 : index
    %57 = vector.load %arg4[%c1_43, %c0_44, %c0_45] : memref<3x128x128xbf16, #tpu.memory_space<vmem>>, vector<1x128x128xbf16>
    %58 = vector.shape_cast %57 : vector<1x128x128xbf16> to vector<128x128xbf16>
    %cst_46 = arith.constant dense<0.000000e+00> : vector<16x128xf32>
    %59 = tpu.matmul %56, %58, %cst_46 {dimension_numbers = #tpu.dot_dimension_numbers<[1], [0], [0], [1], [0, 0, 1, 1], [], []>} : vector<16x128xbf16>, vector<128x128xbf16>, vector<16x128xf32> -> vector<16x128xf32>
    %60 = arith.addf %55, %59 : vector<16x128xf32>
    %61 = vector.extract_strided_slice %50 {offsets = [2, 0], sizes = [16, 128], strides = [1, 1]} : vector<18x128xbf16> to vector<16x128xbf16>
    %c2_47 = arith.constant 2 : index
    %c0_48 = arith.constant 0 : index
    %c0_49 = arith.constant 0 : index
    %62 = vector.load %arg4[%c2_47, %c0_48, %c0_49] : memref<3x128x128xbf16, #tpu.memory_space<vmem>>, vector<1x128x128xbf16>
    %63 = vector.shape_cast %62 : vector<1x128x128xbf16> to vector<128x128xbf16>
    %cst_50 = arith.constant dense<0.000000e+00> : vector<16x128xf32>
    %64 = tpu.matmul %61, %63, %cst_50 {dimension_numbers = #tpu.dot_dimension_numbers<[1], [0], [0], [1], [0, 0, 1, 1], [], []>} : vector<16x128xbf16>, vector<128x128xbf16>, vector<16x128xf32> -> vector<16x128xf32>
    %65 = arith.addf %60, %64 : vector<16x128xf32>
    %66 = vector.extract_strided_slice %33 {offsets = [0, 256], sizes = [16, 128], strides = [1, 1]} : vector<16x384xf32> to vector<16x128xf32>
    %67 = arith.addf %66, %65 : vector<16x128xf32>
    %68 = math.tanh %67 : vector<16x128xf32>
    %cst_51 = arith.constant 1.000000e+00 : f32
    %69 = vector.broadcast %cst_51 : f32 to vector<16x128xf32>
    %70 = arith.subf %69, %45 : vector<16x128xf32>
    %71 = arith.mulf %9, %70 : vector<16x128xf32>
    %72 = arith.mulf %68, %45 : vector<16x128xf32>
    %73 = arith.addf %71, %72 : vector<16x128xf32>
    %c0_52 = arith.constant 0 : index
    %c0_53 = arith.constant 0 : index
    %c0_54 = arith.constant 0 : index
    %74 = vector.load %arg6[%c0_52, %c0_53, %c0_54] : memref<1x16x128xf32, #tpu.memory_space<vmem>>, vector<1x16x128xf32>
    %75 = vector.shape_cast %74 : vector<1x16x128xf32> to vector<16x128xf32>
    %76 = vector.shape_cast %73 : vector<16x128xf32> to vector<1x16x128xf32>
    tpu.vector_store %arg6[%c0_52, %c0_53, %c0_54], %76 {strides = array<i32>} : memref<1x16x128xf32, #tpu.memory_space<vmem>>, vector<1x16x128xf32>,
    return
  }
  func.func @transform_0(%arg0: i32) -> (i32, i32, i32) {
    %c0_i32 = arith.constant 0 : i32
    %c0_i32_0 = arith.constant 0 : i32
    %c0_i32_1 = arith.constant 0 : i32
    return %arg0, %c0_i32, %c0_i32_0 : i32, i32, i32
  }
  func.func @transform_1(%arg0: i32) -> (i32, i32, i32) {
    %c0_i32 = arith.constant 0 : i32
    %c0_i32_0 = arith.constant 0 : i32
    %c0_i32_1 = arith.constant 0 : i32
    return %arg0, %c0_i32, %c0_i32_0 : i32, i32, i32
  }
  func.func @transform_2(%arg0: i32) -> (i32, i32, i32) {
    %c0_i32 = arith.constant 0 : i32
    %c0_i32_0 = arith.constant 0 : i32
    %c0_i32_1 = arith.constant 0 : i32
    %c0_i32_2 = arith.constant 0 : i32
    return %c0_i32, %c0_i32_0, %c0_i32_1 : i32, i32, i32
  }
  func.func @transform_3(%arg0: i32) -> (i32, i32, i32) {
    %c0_i32 = arith.constant 0 : i32
    %c0_i32_0 = arith.constant 0 : i32
    %c0_i32_1 = arith.constant 0 : i32
    %c0_i32_2 = arith.constant 0 : i32
    return %c0_i32, %c0_i32_0, %c0_i32_1 : i32, i32, i32
  }
  func.func @transform_4(%arg0: i32) -> (i32, i32) {
    %c0_i32 = arith.constant 0 : i32
    %c0_i32_0 = arith.constant 0 : i32
    %c0_i32_1 = arith.constant 0 : i32
    return %c0_i32, %c0_i32_0 : i32, i32
  }
  func.func @transform_5(%arg0: i32) -> (i32, i32, i32) {
    %c0_i32 = arith.constant 0 : i32
    %c0_i32_0 = arith.constant 0 : i32
    %c0_i32_1 = arith.constant 0 : i32
    return %arg0, %c0_i32, %c0_i32_0 : i32, i32, i32
  }
}

</mosaic_0001>

<llo_original>
// kernel: tpu_custom_call.1
$region0: #{tpu_custom_call.1}
  #allocation0 [shape = 'u32[]', space=smem, size = 0x4, offset = 0x4, fixed_abs, tag = 'smem constant byte address 0x4 - core index']
  #allocation1 [shape = 'u32[72,128]{1,0:T(1,128)}', space=vmem, size = 0x9000, scoped, tag = 'internal scratch']
  #allocation2 [shape = 'f32[18,192]{1,0:T(8,128)}', space=vmem, size = 0x6000, scoped, tag = 'scratch operand']
  #allocation3 [shape = 'f32[18,128]{1,0:T(8,128)}', space=vmem, size = 0x3000, scoped, tag = 'scratch operand']
  %s0 = inlined_call_operand.hbm [shape: f32[2,16,64], index: 0, kind: input, shape index: {}]
  %s1 = inlined_call_operand.hbm [shape: f32[2,16,128], index: 1, kind: input, shape index: {}]
  %s2 = inlined_call_operand.hbm [shape: bf16[3,192,384], index: 2, kind: input, shape index: {}]
  %s3 = inlined_call_operand.hbm [shape: bf16[3,128,128], index: 3, kind: input, shape index: {}]
  %s4 = inlined_call_operand.vmem [shape: f32[1,384], index: 4, kind: input, shape index: {}]
  %s5 = inlined_call_operand.hbm [shape: f32[2,16,128], index: 5, kind: output, shape index: {}]
  %s6 = sld [smem:[#allocation0]]
  $region69: #{tpu_custom_call.1} parent=0
    _
  %s8 = ssub.s32 1, %s6
  %s9 = scalar_select 0, %s8, %s6
  $region1: #{tpu_custom_call.1} parent=0
    #allocation4 [shape = 'u8[16384]{0}', space=vmem, size = 0x4000, scoped, tag = 'input window, operand 0']
    #allocation5 [shape = 's32[2]{0}', space=sflag, size = 0x8, scoped, tag = 'scoped memory for tpu_custom_call.1']
    #allocation6 [shape = 's32[2]{0}', space=sflag, size = 0x8, scoped, tag = 'scoped memory for tpu_custom_call.1']
    #allocation7 [shape = 'u8[16384]{0}', space=vmem, size = 0x4000, scoped, tag = 'input window, operand 1']
    #allocation8 [shape = 's32[2]{0}', space=sflag, size = 0x8, scoped, tag = 'scoped memory for tpu_custom_call.1']
    #allocation9 [shape = 'u8[442368]{0}', space=vmem, size = 0x6c000, scoped, tag = 'input window, operand 2, single buffered']
    #allocation10 [shape = 'u8[98304]{0}', space=vmem, size = 0x18000, scoped, tag = 'input window, operand 3, single buffered']
    #allocation11 [shape = 's32[1]{0}', space=sflag, size = 0x4, scoped, tag = 'scoped memory for tpu_custom_call.1']
    #allocation12 [shape = 'u8[16384]{0}', space=vmem, size = 0x4000, scoped, tag = 'output window, operand 0']
    %10 = vsyncpa [#allocation5], 0
    %s11 = scalar_lea.sflag [#allocation5], 1
    %12 = vsyncpa %s11, 0
    %13 = vsyncpa [#allocation8], 0
    %s14 = scalar_lea.sflag [#allocation8], 1
    %15 = vsyncpa %s14, 0
    %16 = vsyncpa [#allocation11], 0
    %17 = vsyncpa [#allocation6], 0
    %s18 = scalar_lea.sflag [#allocation6], 1
    %19 = vsyncpa %s18, 0
    loop: start=0, step=1, limit=4
    $region2: #{tpu_custom_call.1} parent=1 // loop_pre_header
      _
    $region3: #{tpu_custom_call.1} parent=1 // loop_header
      %s21 = sphi 0, %s25
      %p22 = scmp.ge.s32.totalorder %s21, 4
      %s31 = sphi 0, %s33
      %s34 = sphi 0, %s31
      %s35 = sphi 0, %s34
      %s51 = sphi 0, %s35
      %s57 = sphi 0, %s59
      %s60 = sphi 0, %s57
      %s61 = sphi 0, %s60
      %s77 = sphi 0, %s61
      %s81 = sphi 0, %s81
      %s83 = sphi 0, %s81
      %s84 = sphi 0, %s83
      %s98 = sphi 0, %s84
      %s102 = sphi 0, %s102
      %s104 = sphi 0, %s102
      %s105 = sphi 0, %s104
      %s119 = sphi 0, %s105
      %s123 = sphi 0, %s123
      %s125 = sphi 0, %s123
      %s126 = sphi 0, %s125
      %s140 = sphi 0, %s126
      %s146 = sphi 0, %s148
      %s149 = sphi 0, %s146
      %s150 = sphi 0, %s149
      %s166 = sphi 0, %s150
    $region4: #{tpu_custom_call.1} parent=1 // loop_header_branch
      %24 = sbr.rel (%p22) target = $region8
    $region5: #{tpu_custom_call.1} parent=1 // loop_body
      %s26 = ssub.s32 %s21, 1
      %s27 = ssub.s32 %s21, 2
      %s28 = sadd.s32 %s21, 1
      %s29 = ssub.s32 %s21, %s28
      %p30 = scmp.eq.s32.totalorder %s29, 0
      %s32 = sadd.s32 %s31, 1
      %s33 = scalar_select %p30, %s31, %s32
      %p36 = pneg %p30
      %p37 = scmp.eq.s32.totalorder %s21, 1
      %p38 = por %p36, %p37
      %p39 = scmp.ne.s32.totalorder %s31, %s34
      %p40 = scmp.eq.s32.totalorder %s21, 0
      %p41 = por %p39, %p40
      %p42 = scmp.ne.s32.totalorder %s31, %s34
      %p43 = scmp.eq.s32.totalorder %s26, 1
      %p44 = por %p42, %p43
      %p45 = scmp.ne.s32.totalorder %s34, %s35
      %p46 = scmp.eq.s32.totalorder %s26, 0
      %p47 = por %p45, %p46
      %p48 = scmp.ne.s32.totalorder %s34, %s35
      %p49 = scmp.eq.s32.totalorder %s27, 1
      %p50 = por %p48, %p49
      %p52 = scmp.ne.s32.totalorder %s35, %s51
      %p53 = scmp.eq.s32.totalorder %s27, 0
      %p54 = por %p52, %p53
      %s55 = ssub.s32 %s21, %s28
      %p56 = scmp.eq.s32.totalorder %s55, 0
      %s58 = sadd.s32 %s57, 1
      %s59 = scalar_select %p56, %s57, %s58
      %p62 = pneg %p56
      %p63 = scmp.eq.s32.totalorder %s21, 1
      %p64 = por %p62, %p63
      %p65 = scmp.ne.s32.totalorder %s57, %s60
      %p66 = scmp.eq.s32.totalorder %s21, 0
      %p67 = por %p65, %p66
      %p68 = scmp.ne.s32.totalorder %s57, %s60
      %p69 = scmp.eq.s32.totalorder %s26, 1
      %p70 = por %p68, %p69
      %p71 = scmp.ne.s32.totalorder %s60, %s61
      %p72 = scmp.eq.s32.totalorder %s26, 0
      %p73 = por %p71, %p72
      %p74 = scmp.ne.s32.totalorder %s60, %s61
      %p75 = scmp.eq.s32.totalorder %s27, 1
      %p76 = por %p74, %p75
      %p78 = scmp.ne.s32.totalorder %s61, %s77
      %p79 = scmp.eq.s32.totalorder %s27, 0
      %p80 = por %p78, %p79
      %s82 = sadd.s32 %s81, 1
      %p85 = scmp.eq.s32.totalorder %s21, 1
      %p86 = scmp.ne.s32.totalorder %s81, %s83
      %p87 = scmp.eq.s32.totalorder %s21, 0
      %p88 = por %p86, %p87
      %p89 = scmp.ne.s32.totalorder %s81, %s83
      %p90 = scmp.eq.s32.totalorder %s26, 1
      %p91 = por %p89, %p90
      %p92 = scmp.ne.s32.totalorder %s83, %s84
      %p93 = scmp.eq.s32.totalorder %s26, 0
      %p94 = por %p92, %p93
      %p95 = scmp.ne.s32.totalorder %s83, %s84
      %p96 = scmp.eq.s32.totalorder %s27, 1
      %p97 = por %p95, %p96
      %p99 = scmp.ne.s32.totalorder %s84, %s98
      %p100 = scmp.eq.s32.totalorder %s27, 0
      %p101 = por %p99, %p100
      %s103 = sadd.s32 %s102, 1
      %p106 = scmp.eq.s32.totalorder %s21, 1
      %p107 = scmp.ne.s32.totalorder %s102, %s104
      %p108 = scmp.eq.s32.totalorder %s21, 0
      %p109 = por %p107, %p108
      %p110 = scmp.ne.s32.totalorder %s102, %s104
      %p111 = scmp.eq.s32.totalorder %s26, 1
      %p112 = por %p110, %p111
      %p113 = scmp.ne.s32.totalorder %s104, %s105
      %p114 = scmp.eq.s32.totalorder %s26, 0
      %p115 = por %p113, %p114
      %p116 = scmp.ne.s32.totalorder %s104, %s105
      %p117 = scmp.eq.s32.totalorder %s27, 1
      %p118 = por %p116, %p117
      %p120 = scmp.ne.s32.totalorder %s105, %s119
      %p121 = scmp.eq.s32.totalorder %s27, 0
      %p122 = por %p120, %p121
      %s124 = sadd.s32 %s123, 1
      %p127 = scmp.eq.s32.totalorder %s21, 1
      %p128 = scmp.ne.s32.totalorder %s123, %s125
      %p129 = scmp.eq.s32.totalorder %s21, 0
      %p130 = por %p128, %p129
      %p131 = scmp.ne.s32.totalorder %s123, %s125
      %p132 = scmp.eq.s32.totalorder %s26, 1
      %p133 = por %p131, %p132
      %p134 = scmp.ne.s32.totalorder %s125, %s126
      %p135 = scmp.eq.s32.totalorder %s26, 0
      %p136 = por %p134, %p135
      %p137 = scmp.ne.s32.totalorder %s125, %s126
      %p138 = scmp.eq.s32.totalorder %s27, 1
      %p139 = por %p137, %p138
      %p141 = scmp.ne.s32.totalorder %s126, %s140
      %p142 = scmp.eq.s32.totalorder %s27, 0
      %p143 = por %p141, %p142
      %s144 = ssub.s32 %s21, %s28
      %p145 = scmp.eq.s32.totalorder %s144, 0
      %s147 = sadd.s32 %s146, 1
      %s148 = scalar_select %p145, %s146, %s147
      %p151 = pneg %p145
      %p152 = scmp.eq.s32.totalorder %s21, 1
      %p153 = por %p151, %p152
      %p154 = scmp.ne.s32.totalorder %s146, %s149
      %p155 = scmp.eq.s32.totalorder %s21, 0
      %p156 = por %p154, %p155
      %p157 = scmp.ne.s32.totalorder %s146, %s149
      %p158 = scmp.eq.s32.totalorder %s26, 1
      %p159 = por %p157, %p158
      %p160 = scmp.ne.s32.totalorder %s149, %s150
      %p161 = scmp.eq.s32.totalorder %s26, 0
      %p162 = por %p160, %p161
      %p163 = scmp.ne.s32.totalorder %s149, %s150
      %p164 = scmp.eq.s32.totalorder %s27, 1
      %p165 = por %p163, %p164
      %p167 = scmp.ne.s32.totalorder %s150, %s166
      %p168 = scmp.eq.s32.totalorder %s27, 0
      %p169 = por %p167, %p168
      %p170 = scmp.le.s32.totalorder 1, %s21
      %p171 = scmp.lt.s32.totalorder %s21, 3
      %p172 = pnand %p170, %p171
      %p173 = pneg %p172
      // Predicated region
      $region9: #{tpu_custom_call.1} parent=5 // pred_check
        _
      $region10: #{tpu_custom_call.1} parent=5 // pred_check_branch
        %175 = sbr.rel (%p172) target = $region12
      $region11: #{tpu_custom_call.1} parent=5 // pred_region
        %s176 = ssub.s32 %s21, 1
        // Predicated region
        $region13: #{tpu_custom_call.1} parent=11 // pred_check
          %p177 = pneg %p94
        $region14: #{tpu_custom_call.1} parent=11 // pred_check_branch
          %179 = sbr.rel (%p177) target = $region16
        $region15: #{tpu_custom_call.1} parent=11 // pred_region
          %181 = vsyncadd [#allocation8], 0
          %s182 = sshll.u32 %s2, 4
          %s183 = int_to_ptr.hbm [resolvable:$true] %s182
          %s184 = sshll.u32 [#allocation9], 4
          %s185 = int_to_ptr.vmem [resolvable:$true] %s184
          %190 = dma.hbm_to_vmem [thread:$0]  %s183, 13824, %s185, [#allocation8], 192, 192, 12
        $region16: #{tpu_custom_call.1} parent=11 // pred_fallthru
          _
        // Predicated region
        $region17: #{tpu_custom_call.1} parent=11 // pred_check
          %p191 = pneg %p115
        $region18: #{tpu_custom_call.1} parent=11 // pred_check_branch
          %193 = sbr.rel (%p191) target = $region20
        $region19: #{tpu_custom_call.1} parent=11 // pred_region
          %195 = vsyncadd [#allocation11], 0
          %s196 = sshll.u32 %s3, 4
          %s197 = int_to_ptr.hbm [resolvable:$true] %s196
          %s198 = sshll.u32 [#allocation10], 4
          %s199 = int_to_ptr.vmem [resolvable:$true] %s198
          %204 = dma.hbm_to_vmem [thread:$0]  %s197, 3072, %s199, [#allocation11], 64, 64, 4
        $region20: #{tpu_custom_call.1} parent=11 // pred_fallthru
          _
        // Predicated region
        $region21: #{tpu_custom_call.1} parent=11 // pred_check
          %p205 = pneg %p136
        $region22: #{tpu_custom_call.1} parent=11 // pred_check_branch
          %207 = sbr.rel (%p205) target = $region24
        $region23: #{tpu_custom_call.1} parent=11 // pred_region
          _
        $region24: #{tpu_custom_call.1} parent=11 // pred_fallthru
          _
      $region12: #{tpu_custom_call.1} parent=5 // pred_fallthru
        _
      %p208 = scmp.lt.s32.totalorder %s21, 2
      // Predicated region
      $region25: #{tpu_custom_call.1} parent=5 // pred_check
        %p209 = pneg %p208
      $region26: #{tpu_custom_call.1} parent=5 // pred_check_branch
        %211 = sbr.rel (%p209) target = $region28
      $region27: #{tpu_custom_call.1} parent=5 // pred_region
        // Predicated region
        $region29: #{tpu_custom_call.1} parent=27 // pred_check
          %p212 = pneg %p41
        $region30: #{tpu_custom_call.1} parent=27 // pred_check_branch
          %214 = sbr.rel (%p212) target = $region32
        $region31: #{tpu_custom_call.1} parent=27 // pred_region
          %s215 = sand.u32 %s31, 1
          %s216 = scalar_lea.sflag [#allocation5], %s215
          %s217 = sand.u32 %s31, 1
          %s218 = smul.addr %s217, 16
          %s219 = scalar_lea.vmem [#allocation4], %s218
          %221 = vsyncadd %s216, 0
          %s222 = smul.addr %s21, 2
          %s223 = smul.addr %s222, 8
          %s224 = scalar_lea.hbm %s0, %s223
          %s225 = sshll.u32 %s224, 4
          %s226 = int_to_ptr.hbm [resolvable:$true] %s225
          %s227 = sshll.u32 %s219, 4
          %s228 = int_to_ptr.vmem [resolvable:$true] %s227
          %233 = dma.hbm_to_vmem [thread:$0]  %s226, 256, %s228, %s216, 128, 128, 8
        $region32: #{tpu_custom_call.1} parent=27 // pred_fallthru
          _
        // Predicated region
        $region33: #{tpu_custom_call.1} parent=27 // pred_check
          %p234 = pneg %p67
        $region34: #{tpu_custom_call.1} parent=27 // pred_check_branch
          %236 = sbr.rel (%p234) target = $region36
        $region35: #{tpu_custom_call.1} parent=27 // pred_region
          %s237 = sand.u32 %s21, 1
          %s238 = scalar_lea.sflag [#allocation8], %s237
          %s239 = sand.u32 %s57, 1
          %s240 = smul.addr %s239, 16
          %s241 = scalar_lea.vmem [#allocation7], %s240
          %243 = vsyncadd %s238, 0
          %s244 = smul.addr %s21, 2
          %s245 = smul.addr %s244, 8
          %s246 = scalar_lea.hbm %s1, %s245
          %s247 = sshll.u32 %s246, 4
          %s248 = int_to_ptr.hbm [resolvable:$true] %s247
          %s249 = sshll.u32 %s241, 4
          %s250 = int_to_ptr.vmem [resolvable:$true] %s249
          %255 = dma.hbm_to_vmem [thread:$0]  %s248, 256, %s250, %s238, 128, 128, 8
        $region36: #{tpu_custom_call.1} parent=27 // pred_fallthru
          _
      $region28: #{tpu_custom_call.1} parent=5 // pred_fallthru
        _
      %p256 = scmp.le.s32.totalorder 1, %s21
      %p257 = scmp.lt.s32.totalorder %s21, 3
      %p258 = pnand %p256, %p257
      %p259 = pneg %p258
      // Predicated region
      $region37: #{tpu_custom_call.1} parent=5 // pred_check
        _
      $region38: #{tpu_custom_call.1} parent=5 // pred_check_branch
        %261 = sbr.rel (%p258) target = $region40
      $region39: #{tpu_custom_call.1} parent=5 // pred_region
        %s262 = ssub.s32 %s21, 1
        %s263 = sand.u32 %s34, 1
        %s264 = scalar_lea.sflag [#allocation5], %s263
        %s265 = sand.u32 %s34, 1
        %s266 = smul.addr %s265, 16
        %s267 = scalar_lea.vmem [#allocation4], %s266
        // Predicated region
        $region41: #{tpu_custom_call.1} parent=39 // pred_check
          %p268 = pneg %p47
        $region42: #{tpu_custom_call.1} parent=39 // pred_check_branch
          %270 = sbr.rel (%p268) target = $region44
        $region43: #{tpu_custom_call.1} parent=39 // pred_region
          %272 = dma.done %s264, 256
        $region44: #{tpu_custom_call.1} parent=39 // pred_fallthru
          _
        %s273 = sand.u32 %s26, 1
        %s274 = scalar_lea.sflag [#allocation8], %s273
        %s275 = sand.u32 %s60, 1
        %s276 = smul.addr %s275, 16
        %s277 = scalar_lea.vmem [#allocation7], %s276
        // Predicated region
        $region45: #{tpu_custom_call.1} parent=39 // pred_check
          %p278 = pneg %p73
        $region46: #{tpu_custom_call.1} parent=39 // pred_check_branch
          %280 = sbr.rel (%p278) target = $region48
        $region47: #{tpu_custom_call.1} parent=39 // pred_region
          %282 = dma.done %s274, 256
        $region48: #{tpu_custom_call.1} parent=39 // pred_fallthru
          _
        // Predicated region
        $region49: #{tpu_custom_call.1} parent=39 // pred_check
          %p283 = pneg %p94
        $region50: #{tpu_custom_call.1} parent=39 // pred_check_branch
          %285 = sbr.rel (%p283) target = $region52
        $region51: #{tpu_custom_call.1} parent=39 // pred_region
          %287 = dma.done [#allocation8], 13824
        $region52: #{tpu_custom_call.1} parent=39 // pred_fallthru
          _
        // Predicated region
        $region53: #{tpu_custom_call.1} parent=39 // pred_check
          %p288 = pneg %p115
        $region54: #{tpu_custom_call.1} parent=39 // pred_check_branch
          %290 = sbr.rel (%p288) target = $region56
        $region55: #{tpu_custom_call.1} parent=39 // pred_region
          %292 = dma.done [#allocation11], 3072
        $region56: #{tpu_custom_call.1} parent=39 // pred_fallthru
          _
        %s293 = sand.u32 %s34, 1
        %s294 = scalar_lea.sflag [#allocation5], %s293
        %s295 = sand.u32 %s34, 1
        %s296 = smul.addr %s295, 16
        %s297 = scalar_lea.vmem [#allocation4], %s296
        %p298 = pneg %p47
        %p299 = pneg %p44
        %s300 = sand.u32 %s26, 1
        %s301 = scalar_lea.sflag [#allocation8], %s300
        %s302 = sand.u32 %s60, 1
        %s303 = smul.addr %s302, 16
        %s304 = scalar_lea.vmem [#allocation7], %s303
        %p305 = pneg %p73
        %p306 = pneg %p70
        %p307 = pneg %p94
        %p308 = pneg %p91
        %p309 = pneg %p115
        %p310 = pneg %p112
        %p311 = pneg %p136
        %p312 = pneg %p133
        %p313 = pneg %p162
        %p314 = pneg %p159
        %s315 = sand.u32 %s149, 1
        %s316 = scalar_lea.sflag [#allocation6], %s315
        %s317 = sand.u32 %s149, 1
        %s318 = smul.addr %s317, 16
        %s319 = scalar_lea.vmem [#allocation12], %s318
        %v321 = vlaneseq
        %vm322 = vcmp.ge.s32.totalorder %v321, 0
        %vm323 = vcmp.lt.s32.totalorder %v321, 192
        %vm324 = vmand %vm322, %vm323
        %325 = vst.msk [vmem:[#allocation2] ss:$8 sm:$0x3] %vm324, 0.0
        %326 = vst.msk [vmem:[#allocation2] ss:$8 sm:$0x0] %vm324, 0.0
        %s327 = scalar_lea.vmem [#allocation2], 33
        %328 = vst.msk [vmem:[%s327] ss:$8 sm:$0x3] %vm324, 0.0
        %329 = vst.msk [vmem:[%s327] ss:$8 sm:$0x0] %vm324, 0.0
        %330 = vst [vmem:[#allocation3] sm:$0x1] 0.0
        %331 = vst [vmem:[#allocation3 + $0x11] sm:$0x1] 0.0
        %v332 = vld [vmem:[%s277] sm:$0xff]
        %v333 = vld [vmem:[%s277 + $0x8] sm:$0xff]
        %vm336 = vcmask 1040384
        %v337 = vrot.slane %v332, 7
        %v338 = vrot.slane %v333, 7
        %v339 = vsel %vm336, %v337, %v338
        %343 = vst [vmem:[#allocation2] sm:$0xfe] %v337
        %344 = vst [vmem:[#allocation2 + $0x10] sm:$0xff] %v339
        %345 = vst [vmem:[#allocation2 + $0x20] sm:$0x1] %v338
        %v346 = vld [vmem:[%s267] sm:$0xff]
        %v347 = vld [vmem:[%s267 + $0x8] sm:$0xff]
        %v350 = vrot.slane %v346, 7
        %v351 = vrot.slane %v347, 7
        %v352 = vsel %vm336, %v350, %v351
        %vm356 = vcmask 523265
        %357 = vst.msk [vmem:[#allocation2 + $0x8] sm:$0xfe] %vm356, %v350
        %vm358 = vcmask 523264
        %359 = vst.msk [vmem:[#allocation2 + $0x18] sm:$0xff] %vm358, %v352
        %vm360 = vcmask 516096
        %361 = vst.msk [vmem:[#allocation2 + $0x28] sm:$0x1] %vm360, %v351
        %v362 = vld [vmem:[%s4] sm:$0x7]
        %v364 = vperm.slane %v362, 0
        %v365 = vperm.slane %v362, 1
        %v366 = vperm.slane %v362, 2
        %v370 = vld [vmem:[#allocation2] sm:$0xff]
        %v371 = vld [vmem:[#allocation2 + $0x8] sm:$0xff]
        %v372 = vld [vmem:[#allocation2 + $0x10] sm:$0xff]
        %v373 = vld [vmem:[#allocation2 + $0x18] sm:$0xff]
        %v374 = vld [vmem:[#allocation2 + $0x20] sm:$0x3]
        %v375 = vld [vmem:[#allocation2 + $0x28] sm:$0x3]
        %v376 = vpack.c.bf16 %v371, %v370
        %v377 = vpack.c.bf16 %v373, %v372
        %v378 = vpack.c.bf16 %v375, %v374
        %v379 = vld [vmem:[#allocation9] sm:$0xff]
        %v380 = vld [vmem:[#allocation9 + $0x8] sm:$0xf]
        %v381 = vld [vmem:[#allocation9 + $0xc] sm:$0xff]
        %v382 = vld [vmem:[#allocation9 + $0x14] sm:$0xf]
        %v383 = vld [vmem:[#allocation9 + $0x18] sm:$0xff]
        %v384 = vld [vmem:[#allocation9 + $0x20] sm:$0xf]
        %v385 = vld [vmem:[#allocation9 + $0x24] sm:$0xff]
        %v386 = vld [vmem:[#allocation9 + $0x2c] sm:$0xf]
        %v387 = vld [vmem:[#allocation9 + $0x30] sm:$0xff]
        %v388 = vld [vmem:[#allocation9 + $0x38] sm:$0xf]
        %v389 = vld [vmem:[#allocation9 + $0x3c] sm:$0xff]
        %v390 = vld [vmem:[#allocation9 + $0x44] sm:$0xf]
        %v391 = vld [vmem:[#allocation9 + $0x48] sm:$0xff]
        %v392 = vld [vmem:[#allocation9 + $0x50] sm:$0xf]
        %v393 = vld [vmem:[#allocation9 + $0x54] sm:$0xff]
        %v394 = vld [vmem:[#allocation9 + $0x5c] sm:$0xf]
        %v395 = vld [vmem:[#allocation9 + $0x60] sm:$0xff]
        %v396 = vld [vmem:[#allocation9 + $0x68] sm:$0xf]
        %v397 = vld [vmem:[#allocation9 + $0x6c] sm:$0xff]
        %v398 = vld [vmem:[#allocation9 + $0x74] sm:$0xf]
        %v399 = vld [vmem:[#allocation9 + $0x78] sm:$0xff]
        %v400 = vld [vmem:[#allocation9 + $0x80] sm:$0xf]
        %v401 = vld [vmem:[#allocation9 + $0x84] sm:$0xff]
        %v402 = vld [vmem:[#allocation9 + $0x8c] sm:$0xf]
        %v403 = vld [vmem:[#allocation9 + $0x90] sm:$0xff]
        %v404 = vld [vmem:[#allocation9 + $0x98] sm:$0xf]
        %v405 = vld [vmem:[#allocation9 + $0x9c] sm:$0xff]
        %v406 = vld [vmem:[#allocation9 + $0xa4] sm:$0xf]
        %v407 = vld [vmem:[#allocation9 + $0xa8] sm:$0xff]
        %v408 = vld [vmem:[#allocation9 + $0xb0] sm:$0xf]
        %v409 = vld [vmem:[#allocation9 + $0xb4] sm:$0xff]
        %v410 = vld [vmem:[#allocation9 + $0xbc] sm:$0xf]
        %v411 = vld [vmem:[#allocation9 + $0xc0] sm:$0xff]
        %v412 = vld [vmem:[#allocation9 + $0xc8] sm:$0xf]
        %v413 = vld [vmem:[#allocation9 + $0xcc] sm:$0xff]
        %v414 = vld [vmem:[#allocation9 + $0xd4] sm:$0xf]
        %v415 = vld [vmem:[#allocation9 + $0xd8] sm:$0xff]
        %v416 = vld [vmem:[#allocation9 + $0xe0] sm:$0xf]
        %v417 = vld [vmem:[#allocation9 + $0xe4] sm:$0xff]
        %v418 = vld [vmem:[#allocation9 + $0xec] sm:$0xf]
        %v419 = vld [vmem:[#allocation9 + $0xf0] sm:$0xff]
        %v420 = vld [vmem:[#allocation9 + $0xf8] sm:$0xf]
        %v421 = vld [vmem:[#allocation9 + $0xfc] sm:$0xff]
        %v422 = vld [vmem:[#allocation9 + $0x104] sm:$0xf]
        %v423 = vld [vmem:[#allocation9 + $0x108] sm:$0xff]
        %v424 = vld [vmem:[#allocation9 + $0x110] sm:$0xf]
        %v425 = vld [vmem:[#allocation9 + $0x114] sm:$0xff]
        %v426 = vld [vmem:[#allocation9 + $0x11c] sm:$0xf]
        %v429 = vunpack.c.l.b16 %v376
        %v430 = vunpack.c.h.b16 %v376
        %v431 = vunpack.c.l.b16 %v377
        %v432 = vunpack.c.h.b16 %v377
        %v433 = vpack.c.b16 %v431, %v429
        %v434 = vpack.c.b16 %v432, %v430
        %v484 = vunpack.c.l.b16 %v379
        %v485 = vunpack.c.h.b16 %v379
        %v486 = vunpack.c.l.b16 %v380
        %v487 = vunpack.c.l.b16 %v381
        %v488 = vunpack.c.h.b16 %v381
        %v489 = vunpack.c.l.b16 %v382
        %v490 = vunpack.c.l.b16 %v383
        %v491 = vunpack.c.h.b16 %v383
        %v492 = vunpack.c.l.b16 %v384
        %v493 = vunpack.c.l.b16 %v385
        %v494 = vunpack.c.h.b16 %v385
        %v495 = vunpack.c.l.b16 %v386
        %v496 = vunpack.c.l.b16 %v387
        %v497 = vunpack.c.h.b16 %v387
        %v498 = vunpack.c.l.b16 %v388
        %v499 = vunpack.c.l.b16 %v389
        %v500 = vunpack.c.h.b16 %v389
        %v501 = vunpack.c.l.b16 %v390
        %v502 = vunpack.c.l.b16 %v391
        %v503 = vunpack.c.h.b16 %v391
        %v504 = vunpack.c.l.b16 %v392
        %v505 = vunpack.c.l.b16 %v393
        %v506 = vunpack.c.h.b16 %v393
        %v507 = vunpack.c.l.b16 %v394
        %v508 = vunpack.c.l.b16 %v395
        %v509 = vunpack.c.h.b16 %v395
        %v510 = vunpack.c.l.b16 %v396
        %v511 = vunpack.c.l.b16 %v397
        %v512 = vunpack.c.h.b16 %v397
        %v513 = vunpack.c.l.b16 %v398
        %v514 = vunpack.c.l.b16 %v399
        %v515 = vunpack.c.h.b16 %v399
        %v516 = vunpack.c.l.b16 %v400
        %v517 = vunpack.c.l.b16 %v401
        %v518 = vunpack.c.h.b16 %v401
        %v519 = vunpack.c.l.b16 %v402
        %v520 = vunpack.c.l.b16 %v403
        %v521 = vunpack.c.h.b16 %v403
        %v522 = vunpack.c.l.b16 %v404
        %v523 = vunpack.c.l.b16 %v405
        %v524 = vunpack.c.h.b16 %v405
        %v525 = vunpack.c.l.b16 %v406
        %v526 = vunpack.c.l.b16 %v407
        %v527 = vunpack.c.h.b16 %v407
        %v528 = vunpack.c.l.b16 %v408
        %v529 = vunpack.c.l.b16 %v409
        %v530 = vunpack.c.h.b16 %v409
        %v531 = vunpack.c.l.b16 %v410
        %v532 = vunpack.c.l.b16 %v411
        %v533 = vunpack.c.h.b16 %v411
        %v534 = vunpack.c.l.b16 %v412
        %v535 = vunpack.c.l.b16 %v413
        %v536 = vunpack.c.h.b16 %v413
        %v537 = vunpack.c.l.b16 %v414
        %v538 = vunpack.c.l.b16 %v415
        %v539 = vunpack.c.h.b16 %v415
        %v540 = vunpack.c.l.b16 %v416
        %v541 = vunpack.c.l.b16 %v417
        %v542 = vunpack.c.h.b16 %v417
        %v543 = vunpack.c.l.b16 %v418
        %v544 = vunpack.c.l.b16 %v419
        %v545 = vunpack.c.h.b16 %v419
        %v546 = vunpack.c.l.b16 %v420
        %v547 = vunpack.c.l.b16 %v421
        %v548 = vunpack.c.h.b16 %v421
        %v549 = vunpack.c.l.b16 %v422
        %v550 = vunpack.c.l.b16 %v423
        %v551 = vunpack.c.h.b16 %v423
        %v552 = vunpack.c.l.b16 %v424
        %v553 = vunpack.c.l.b16 %v425
        %v554 = vunpack.c.h.b16 %v425
        %v555 = vunpack.c.l.b16 %v426
        %v556 = vpack.c.b16 %v487, %v484
        %v557 = vpack.c.b16 %v488, %v485
        %v558 = vpack.c.b16 %v489, %v486
        %v559 = vpack.c.b16 %v493, %v490
        %v560 = vpack.c.b16 %v494, %v491
        %v561 = vpack.c.b16 %v495, %v492
        %v562 = vpack.c.b16 %v499, %v496
        %v563 = vpack.c.b16 %v500, %v497
        %v564 = vpack.c.b16 %v501, %v498
        %v565 = vpack.c.b16 %v505, %v502
        %v566 = vpack.c.b16 %v506, %v503
        %v567 = vpack.c.b16 %v507, %v504
        %v568 = vpack.c.b16 %v511, %v508
        %v569 = vpack.c.b16 %v512, %v509
        %v570 = vpack.c.b16 %v513, %v510
        %v571 = vpack.c.b16 %v517, %v514
        %v572 = vpack.c.b16 %v518, %v515
        %v573 = vpack.c.b16 %v519, %v516
        %v574 = vpack.c.b16 %v523, %v520
        %v575 = vpack.c.b16 %v524, %v521
        %v576 = vpack.c.b16 %v525, %v522
        %v577 = vpack.c.b16 %v529, %v526
        %v578 = vpack.c.b16 %v530, %v527
        %v579 = vpack.c.b16 %v531, %v528
        %v580 = vpack.c.b16 %v535, %v532
        %v581 = vpack.c.b16 %v536, %v533
        %v582 = vpack.c.b16 %v537, %v534
        %v583 = vpack.c.b16 %v541, %v538
        %v584 = vpack.c.b16 %v542, %v539
        %v585 = vpack.c.b16 %v543, %v540
        %v586 = vpack.c.b16 %v547, %v544
        %v587 = vpack.c.b16 %v548, %v545
        %v588 = vpack.c.b16 %v549, %v546
        %v589 = vpack.c.b16 %v553, %v550
        %v590 = vpack.c.b16 %v554, %v551
        %v591 = vpack.c.b16 %v555, %v552
        %v629 = vsel %vm358, %v434, 0
        %631 = vmatpush.bf16.msra.mxu0 %v577
        %632 = vmatpush.bf16.msra.mxu0 %v574
        %633 = vmatpush.bf16.msra.mxu0 %v571
        %634 = vmatpush.bf16.msra.mxu0 %v568
        %635 = vmatpush.bf16.msra.mxu0 %v565
        %636 = vmatpush.bf16.msra.mxu0 %v562
        %637 = vmatpush.bf16.msra.mxu0 %v559
        %638 = vmatpush.bf16.msra.mxu0 %v556
        %639 = vmatmul.bf16.gmra.mxu0 %v433
        %v640 = vpop.f32.mrf.mxu0
        %v641 = vadd.f32 0.0, %v640
        %v642 = vpop.f32.mrf.mxu0
        %v643 = vadd.f32 0.0, %v642
        %644 = vdwg.mxu0
        %645 = vmatpush.bf16.msra.mxu0 0
        %646 = vmatpush.bf16.msra.mxu0 0
        %647 = vmatpush.bf16.msra.mxu0 0
        %648 = vmatpush.bf16.msra.mxu0 0
        %649 = vmatpush.bf16.msra.mxu0 %v589
        %650 = vmatpush.bf16.msra.mxu0 %v586
        %651 = vmatpush.bf16.msra.mxu0 %v583
        %652 = vmatpush.bf16.msra.mxu0 %v580
        %653 = vmatmul.bf16.gmra.mxu0 %v629
        %v654 = vpop.f32.mrf.mxu0
        %v655 = vadd.f32 %v641, %v654
        %v656 = vpop.f32.mrf.mxu0
        %v657 = vadd.f32 %v643, %v656
        %658 = vdwg.mxu0
        %659 = vmatpush.bf16.msra.mxu0 %v578
        %660 = vmatpush.bf16.msra.mxu0 %v575
        %661 = vmatpush.bf16.msra.mxu0 %v572
        %662 = vmatpush.bf16.msra.mxu0 %v569
        %663 = vmatpush.bf16.msra.mxu0 %v566
        %664 = vmatpush.bf16.msra.mxu0 %v563
        %665 = vmatpush.bf16.msra.mxu0 %v560
        %666 = vmatpush.bf16.msra.mxu0 %v557
        %667 = vmatmul.bf16.gmra.mxu0 %v433
        %v668 = vpop.f32.mrf.mxu0
        %v669 = vadd.f32 0.0, %v668
        %v670 = vpop.f32.mrf.mxu0
        %v671 = vadd.f32 0.0, %v670
        %672 = vdwg.mxu0
        %673 = vmatpush.bf16.msra.mxu0 0
        %674 = vmatpush.bf16.msra.mxu0 0
        %675 = vmatpush.bf16.msra.mxu0 0
        %676 = vmatpush.bf16.msra.mxu0 0
        %677 = vmatpush.bf16.msra.mxu0 %v590
        %678 = vmatpush.bf16.msra.mxu0 %v587
        %679 = vmatpush.bf16.msra.mxu0 %v584
        %680 = vmatpush.bf16.msra.mxu0 %v581
        %681 = vmatmul.bf16.gmra.mxu0 %v629
        %v682 = vpop.f32.mrf.mxu0
        %v683 = vadd.f32 %v669, %v682
        %v684 = vpop.f32.mrf.mxu0
        %v685 = vadd.f32 %v671, %v684
        %686 = vdwg.mxu0
        %687 = vmatpush.bf16.msra.mxu0 %v579
        %688 = vmatpush.bf16.msra.mxu0 %v576
        %689 = vmatpush.bf16.msra.mxu0 %v573
        %690 = vmatpush.bf16.msra.mxu0 %v570
        %691 = vmatpush.bf16.msra.mxu0 %v567
        %692 = vmatpush.bf16.msra.mxu0 %v564
        %693 = vmatpush.bf16.msra.mxu0 %v561
        %694 = vmatpush.bf16.msra.mxu0 %v558
        %695 = vmatmul.bf16.gmra.mxu0 %v433
        %v696 = vpop.f32.mrf.mxu0
        %v697 = vadd.f32 0.0, %v696
        %v698 = vpop.f32.mrf.mxu0
        %v699 = vadd.f32 0.0, %v698
        %700 = vdwg.mxu0
        %701 = vmatpush.bf16.msra.mxu0 0
        %702 = vmatpush.bf16.msra.mxu0 0
        %703 = vmatpush.bf16.msra.mxu0 0
        %704 = vmatpush.bf16.msra.mxu0 0
        %705 = vmatpush.bf16.msra.mxu0 %v591
        %706 = vmatpush.bf16.msra.mxu0 %v588
        %707 = vmatpush.bf16.msra.mxu0 %v585
        %708 = vmatpush.bf16.msra.mxu0 %v582
        %709 = vmatmul.bf16.gmra.mxu0 %v629
        %v710 = vpop.f32.mrf.mxu0
        %v711 = vadd.f32 %v697, %v710
        %v712 = vpop.f32.mrf.mxu0
        %v713 = vadd.f32 %v699, %v712
        %714 = vdwg.mxu0
        %v715 = vadd.f32 %v364, %v655
        %v716 = vadd.f32 %v365, %v683
        %v717 = vadd.f32 %v366, %v711
        %v718 = vadd.f32 %v364, %v657
        %v719 = vadd.f32 %v365, %v685
        %v720 = vadd.f32 %v366, %v713
        %s721 = scalar_lea.vmem [#allocation9], 288
        %v722 = vld [vmem:[%s721] sm:$0xff]
        %v723 = vld [vmem:[%s721 + $0x8] sm:$0xf]
        %v724 = vld [vmem:[%s721 + $0xc] sm:$0xff]
        %v725 = vld [vmem:[%s721 + $0x14] sm:$0xf]
        %v726 = vld [vmem:[%s721 + $0x18] sm:$0xff]
        %v727 = vld [vmem:[%s721 + $0x20] sm:$0xf]
        %v728 = vld [vmem:[%s721 + $0x24] sm:$0xff]
        %v729 = vld [vmem:[%s721 + $0x2c] sm:$0xf]
        %v730 = vld [vmem:[%s721 + $0x30] sm:$0xff]
        %v731 = vld [vmem:[%s721 + $0x38] sm:$0xf]
        %v732 = vld [vmem:[%s721 + $0x3c] sm:$0xff]
        %v733 = vld [vmem:[%s721 + $0x44] sm:$0xf]
        %v734 = vld [vmem:[%s721 + $0x48] sm:$0xff]
        %v735 = vld [vmem:[%s721 + $0x50] sm:$0xf]
        %v736 = vld [vmem:[%s721 + $0x54] sm:$0xff]
        %v737 = vld [vmem:[%s721 + $0x5c] sm:$0xf]
        %v738 = vld [vmem:[%s721 + $0x60] sm:$0xff]
        %v739 = vld [vmem:[%s721 + $0x68] sm:$0xf]
        %v740 = vld [vmem:[%s721 + $0x6c] sm:$0xff]
        %v741 = vld [vmem:[%s721 + $0x74] sm:$0xf]
        %v742 = vld [vmem:[%s721 + $0x78] sm:$0xff]
        %v743 = vld [vmem:[%s721 + $0x80] sm:$0xf]
        %v744 = vld [vmem:[%s721 + $0x84] sm:$0xff]
        %v745 = vld [vmem:[%s721 + $0x8c] sm:$0xf]
        %v746 = vld [vmem:[%s721 + $0x90] sm:$0xff]
        %v747 = vld [vmem:[%s721 + $0x98] sm:$0xf]
        %v748 = vld [vmem:[%s721 + $0x9c] sm:$0xff]
        %v749 = vld [vmem:[%s721 + $0xa4] sm:$0xf]
        %v750 = vld [vmem:[%s721 + $0xa8] sm:$0xff]
        %v751 = vld [vmem:[%s721 + $0xb0] sm:$0xf]
        %v752 = vld [vmem:[%s721 + $0xb4] sm:$0xff]
        %v753 = vld [vmem:[%s721 + $0xbc] sm:$0xf]
        %v754 = vld [vmem:[%s721 + $0xc0] sm:$0xff]
        %v755 = vld [vmem:[%s721 + $0xc8] sm:$0xf]
        %v756 = vld [vmem:[%s721 + $0xcc] sm:$0xff]
        %v757 = vld [vmem:[%s721 + $0xd4] sm:$0xf]
        %v758 = vld [vmem:[%s721 + $0xd8] sm:$0xff]
        %v759 = vld [vmem:[%s721 + $0xe0] sm:$0xf]
        %v760 = vld [vmem:[%s721 + $0xe4] sm:$0xff]
        %v761 = vld [vmem:[%s721 + $0xec] sm:$0xf]
        %v762 = vld [vmem:[%s721 + $0xf0] sm:$0xff]
        %v763 = vld [vmem:[%s721 + $0xf8] sm:$0xf]
        %v764 = vld [vmem:[%s721 + $0xfc] sm:$0xff]
        %v765 = vld [vmem:[%s721 + $0x104] sm:$0xf]
        %v766 = vld [vmem:[%s721 + $0x108] sm:$0xff]
        %v767 = vld [vmem:[%s721 + $0x110] sm:$0xf]
        %v768 = vld [vmem:[%s721 + $0x114] sm:$0xff]
        %v769 = vld [vmem:[%s721 + $0x11c] sm:$0xf]
        %v771 = vunpack.c.l.b16 %v378
        %v772 = vunpack.c.h.b16 %v378
        %v773 = vpack.c.b16 %v771, %v771
        %v774 = vpack.c.b16 %v772, %v772
        %vm775 = vsmask.f32 7424
        %v777 = vshrl.u32 %v433, 16
        %v779 = vshll.u32 %v433, 16
        %v781 = vrot.slane %v779, 1
        %v782 = vor.u32 %v777, %v781
        %v784 = vshll.u32 %v773, 16
        %v786 = vrot.slane %v784, 1
        %v787 = vsel %vm775, %v782, %v786
        %v788 = vshrl.u32 %v434, 16
        %v790 = vshll.u32 %v434, 16
        %v792 = vrot.slane %v790, 1
        %v793 = vor.u32 %v788, %v792
        %v795 = vshll.u32 %v774, 16
        %v797 = vrot.slane %v795, 1
        %v798 = vsel %vm775, %v793, %v797
        %v848 = vunpack.c.l.b16 %v722
        %v849 = vunpack.c.h.b16 %v722
        %v850 = vunpack.c.l.b16 %v723
        %v851 = vunpack.c.l.b16 %v724
        %v852 = vunpack.c.h.b16 %v724
        %v853 = vunpack.c.l.b16 %v725
        %v854 = vunpack.c.l.b16 %v726
        %v855 = vunpack.c.h.b16 %v726
        %v856 = vunpack.c.l.b16 %v727
        %v857 = vunpack.c.l.b16 %v728
        %v858 = vunpack.c.h.b16 %v728
        %v859 = vunpack.c.l.b16 %v729
        %v860 = vunpack.c.l.b16 %v730
        %v861 = vunpack.c.h.b16 %v730
        %v862 = vunpack.c.l.b16 %v731
        %v863 = vunpack.c.l.b16 %v732
        %v864 = vunpack.c.h.b16 %v732
        %v865 = vunpack.c.l.b16 %v733
        %v866 = vunpack.c.l.b16 %v734
        %v867 = vunpack.c.h.b16 %v734
        %v868 = vunpack.c.l.b16 %v735
        %v869 = vunpack.c.l.b16 %v736
        %v870 = vunpack.c.h.b16 %v736
        %v871 = vunpack.c.l.b16 %v737
        %v872 = vunpack.c.l.b16 %v738
        %v873 = vunpack.c.h.b16 %v738
        %v874 = vunpack.c.l.b16 %v739
        %v875 = vunpack.c.l.b16 %v740
        %v876 = vunpack.c.h.b16 %v740
        %v877 = vunpack.c.l.b16 %v741
        %v878 = vunpack.c.l.b16 %v742
        %v879 = vunpack.c.h.b16 %v742
        %v880 = vunpack.c.l.b16 %v743
        %v881 = vunpack.c.l.b16 %v744
        %v882 = vunpack.c.h.b16 %v744
        %v883 = vunpack.c.l.b16 %v745
        %v884 = vunpack.c.l.b16 %v746
        %v885 = vunpack.c.h.b16 %v746
        %v886 = vunpack.c.l.b16 %v747
        %v887 = vunpack.c.l.b16 %v748
        %v888 = vunpack.c.h.b16 %v748
        %v889 = vunpack.c.l.b16 %v749
        %v890 = vunpack.c.l.b16 %v750
        %v891 = vunpack.c.h.b16 %v750
        %v892 = vunpack.c.l.b16 %v751
        %v893 = vunpack.c.l.b16 %v752
        %v894 = vunpack.c.h.b16 %v752
        %v895 = vunpack.c.l.b16 %v753
        %v896 = vunpack.c.l.b16 %v754
        %v897 = vunpack.c.h.b16 %v754
        %v898 = vunpack.c.l.b16 %v755
        %v899 = vunpack.c.l.b16 %v756
        %v900 = vunpack.c.h.b16 %v756
        %v901 = vunpack.c.l.b16 %v757
        %v902 = vunpack.c.l.b16 %v758
        %v903 = vunpack.c.h.b16 %v758
        %v904 = vunpack.c.l.b16 %v759
        %v905 = vunpack.c.l.b16 %v760
        %v906 = vunpack.c.h.b16 %v760
        %v907 = vunpack.c.l.b16 %v761
        %v908 = vunpack.c.l.b16 %v762
        %v909 = vunpack.c.h.b16 %v762
        %v910 = vunpack.c.l.b16 %v763
        %v911 = vunpack.c.l.b16 %v764
        %v912 = vunpack.c.h.b16 %v764
        %v913 = vunpack.c.l.b16 %v765
        %v914 = vunpack.c.l.b16 %v766
        %v915 = vunpack.c.h.b16 %v766
        %v916 = vunpack.c.l.b16 %v767
        %v917 = vunpack.c.l.b16 %v768
        %v918 = vunpack.c.h.b16 %v768
        %v919 = vunpack.c.l.b16 %v769
        %v920 = vpack.c.b16 %v851, %v848
        %v921 = vpack.c.b16 %v852, %v849
        %v922 = vpack.c.b16 %v853, %v850
        %v923 = vpack.c.b16 %v857, %v854
        %v924 = vpack.c.b16 %v858, %v855
        %v925 = vpack.c.b16 %v859, %v856
        %v926 = vpack.c.b16 %v863, %v860
        %v927 = vpack.c.b16 %v864, %v861
        %v928 = vpack.c.b16 %v865, %v862
        %v929 = vpack.c.b16 %v869, %v866
        %v930 = vpack.c.b16 %v870, %v867
        %v931 = vpack.c.b16 %v871, %v868
        %v932 = vpack.c.b16 %v875, %v872
        %v933 = vpack.c.b16 %v876, %v873
        %v934 = vpack.c.b16 %v877, %v874
        %v935 = vpack.c.b16 %v881, %v878
        %v936 = vpack.c.b16 %v882, %v879
        %v937 = vpack.c.b16 %v883, %v880
        %v938 = vpack.c.b16 %v887, %v884
        %v939 = vpack.c.b16 %v888, %v885
        %v940 = vpack.c.b16 %v889, %v886
        %v941 = vpack.c.b16 %v893, %v890
        %v942 = vpack.c.b16 %v894, %v891
        %v943 = vpack.c.b16 %v895, %v892
        %v944 = vpack.c.b16 %v899, %v896
        %v945 = vpack.c.b16 %v900, %v897
        %v946 = vpack.c.b16 %v901, %v898
        %v947 = vpack.c.b16 %v905, %v902
        %v948 = vpack.c.b16 %v906, %v903
        %v949 = vpack.c.b16 %v907, %v904
        %v950 = vpack.c.b16 %v911, %v908
        %v951 = vpack.c.b16 %v912, %v909
        %v952 = vpack.c.b16 %v913, %v910
        %v953 = vpack.c.b16 %v917, %v914
        %v954 = vpack.c.b16 %v918, %v915
        %v955 = vpack.c.b16 %v919, %v916
        %v993 = vsel %vm358, %v798, 0
        %995 = vmatpush.bf16.msra.mxu0 %v941
        %996 = vmatpush.bf16.msra.mxu0 %v938
        %997 = vmatpush.bf16.msra.mxu0 %v935
        %998 = vmatpush.bf16.msra.mxu0 %v932
        %999 = vmatpush.bf16.msra.mxu0 %v929
        %1000 = vmatpush.bf16.msra.mxu0 %v926
        %1001 = vmatpush.bf16.msra.mxu0 %v923
        %1002 = vmatpush.bf16.msra.mxu0 %v920
        %1003 = vmatmul.bf16.gmra.mxu0 %v787
        %v1004 = vpop.f32.mrf.mxu0
        %v1005 = vadd.f32 0.0, %v1004
        %v1006 = vpop.f32.mrf.mxu0
        %v1007 = vadd.f32 0.0, %v1006
        %1008 = vdwg.mxu0
        %1009 = vmatpush.bf16.msra.mxu0 0
        %1010 = vmatpush.bf16.msra.mxu0 0
        %1011 = vmatpush.bf16.msra.mxu0 0
        %1012 = vmatpush.bf16.msra.mxu0 0
        %1013 = vmatpush.bf16.msra.mxu0 %v953
        %1014 = vmatpush.bf16.msra.mxu0 %v950
        %1015 = vmatpush.bf16.msra.mxu0 %v947
        %1016 = vmatpush.bf16.msra.mxu0 %v944
        %1017 = vmatmul.bf16.gmra.mxu0 %v993
        %v1018 = vpop.f32.mrf.mxu0
        %v1019 = vadd.f32 %v1005, %v1018
        %v1020 = vpop.f32.mrf.mxu0
        %v1021 = vadd.f32 %v1007, %v1020
        %1022 = vdwg.mxu0
        %1023 = vmatpush.bf16.msra.mxu0 %v942
        %1024 = vmatpush.bf16.msra.mxu0 %v939
        %1025 = vmatpush.bf16.msra.mxu0 %v936
        %1026 = vmatpush.bf16.msra.mxu0 %v933
        %1027 = vmatpush.bf16.msra.mxu0 %v930
        %1028 = vmatpush.bf16.msra.mxu0 %v927
        %1029 = vmatpush.bf16.msra.mxu0 %v924
        %1030 = vmatpush.bf16.msra.mxu0 %v921
        %1031 = vmatmul.bf16.gmra.mxu0 %v787
        %v1032 = vpop.f32.mrf.mxu0
        %v1033 = vadd.f32 0.0, %v1032
        %v1034 = vpop.f32.mrf.mxu0
        %v1035 = vadd.f32 0.0, %v1034
        %1036 = vdwg.mxu0
        %1037 = vmatpush.bf16.msra.mxu0 0
        %1038 = vmatpush.bf16.msra.mxu0 0
        %1039 = vmatpush.bf16.msra.mxu0 0
        %1040 = vmatpush.bf16.msra.mxu0 0
        %1041 = vmatpush.bf16.msra.mxu0 %v954
        %1042 = vmatpush.bf16.msra.mxu0 %v951
        %1043 = vmatpush.bf16.msra.mxu0 %v948
        %1044 = vmatpush.bf16.msra.mxu0 %v945
        %1045 = vmatmul.bf16.gmra.mxu0 %v993
        %v1046 = vpop.f32.mrf.mxu0
        %v1047 = vadd.f32 %v1033, %v1046
        %v1048 = vpop.f32.mrf.mxu0
        %v1049 = vadd.f32 %v1035, %v1048
        %1050 = vdwg.mxu0
        %1051 = vmatpush.bf16.msra.mxu0 %v943
        %1052 = vmatpush.bf16.msra.mxu0 %v940
        %1053 = vmatpush.bf16.msra.mxu0 %v937
        %1054 = vmatpush.bf16.msra.mxu0 %v934
        %1055 = vmatpush.bf16.msra.mxu0 %v931
        %1056 = vmatpush.bf16.msra.mxu0 %v928
        %1057 = vmatpush.bf16.msra.mxu0 %v925
        %1058 = vmatpush.bf16.msra.mxu0 %v922
        %1059 = vmatmul.bf16.gmra.mxu0 %v787
        %v1060 = vpop.f32.mrf.mxu0
        %v1061 = vadd.f32 0.0, %v1060
        %v1062 = vpop.f32.mrf.mxu0
        %v1063 = vadd.f32 0.0, %v1062
        %1064 = vdwg.mxu0
        %1065 = vmatpush.bf16.msra.mxu0 0
        %1066 = vmatpush.bf16.msra.mxu0 0
        %1067 = vmatpush.bf16.msra.mxu0 0
        %1068 = vmatpush.bf16.msra.mxu0 0
        %1069 = vmatpush.bf16.msra.mxu0 %v955
        %1070 = vmatpush.bf16.msra.mxu0 %v952
        %1071 = vmatpush.bf16.msra.mxu0 %v949
        %1072 = vmatpush.bf16.msra.mxu0 %v946
        %1073 = vmatmul.bf16.gmra.mxu0 %v993
        %v1074 = vpop.f32.mrf.mxu0
        %v1075 = vadd.f32 %v1061, %v1074
        %v1076 = vpop.f32.mrf.mxu0
        %v1077 = vadd.f32 %v1063, %v1076
        %1078 = vdwg.mxu0
        %v1079 = vadd.f32 %v715, %v1019
        %v1080 = vadd.f32 %v716, %v1047
        %v1081 = vadd.f32 %v717, %v1075
        %v1082 = vadd.f32 %v718, %v1021
        %v1083 = vadd.f32 %v719, %v1049
        %v1084 = vadd.f32 %v720, %v1077
        %s1085 = scalar_lea.vmem [#allocation9], 576
        %v1086 = vld [vmem:[%s1085] sm:$0xff]
        %v1087 = vld [vmem:[%s1085 + $0x8] sm:$0xf]
        %v1088 = vld [vmem:[%s1085 + $0xc] sm:$0xff]
        %v1089 = vld [vmem:[%s1085 + $0x14] sm:$0xf]
        %v1090 = vld [vmem:[%s1085 + $0x18] sm:$0xff]
        %v1091 = vld [vmem:[%s1085 + $0x20] sm:$0xf]
        %v1092 = vld [vmem:[%s1085 + $0x24] sm:$0xff]
        %v1093 = vld [vmem:[%s1085 + $0x2c] sm:$0xf]
        %v1094 = vld [vmem:[%s1085 + $0x30] sm:$0xff]
        %v1095 = vld [vmem:[%s1085 + $0x38] sm:$0xf]
        %v1096 = vld [vmem:[%s1085 + $0x3c] sm:$0xff]
        %v1097 = vld [vmem:[%s1085 + $0x44] sm:$0xf]
        %v1098 = vld [vmem:[%s1085 + $0x48] sm:$0xff]
        %v1099 = vld [vmem:[%s1085 + $0x50] sm:$0xf]
        %v1100 = vld [vmem:[%s1085 + $0x54] sm:$0xff]
        %v1101 = vld [vmem:[%s1085 + $0x5c] sm:$0xf]
        %v1102 = vld [vmem:[%s1085 + $0x60] sm:$0xff]
        %v1103 = vld [vmem:[%s1085 + $0x68] sm:$0xf]
        %v1104 = vld [vmem:[%s1085 + $0x6c] sm:$0xff]
        %v1105 = vld [vmem:[%s1085 + $0x74] sm:$0xf]
        %v1106 = vld [vmem:[%s1085 + $0x78] sm:$0xff]
        %v1107 = vld [vmem:[%s1085 + $0x80] sm:$0xf]
        %v1108 = vld [vmem:[%s1085 + $0x84] sm:$0xff]
        %v1109 = vld [vmem:[%s1085 + $0x8c] sm:$0xf]
        %v1110 = vld [vmem:[%s1085 + $0x90] sm:$0xff]
        %v1111 = vld [vmem:[%s1085 + $0x98] sm:$0xf]
        %v1112 = vld [vmem:[%s1085 + $0x9c] sm:$0xff]
        %v1113 = vld [vmem:[%s1085 + $0xa4] sm:$0xf]
        %v1114 = vld [vmem:[%s1085 + $0xa8] sm:$0xff]
        %v1115 = vld [vmem:[%s1085 + $0xb0] sm:$0xf]
        %v1116 = vld [vmem:[%s1085 + $0xb4] sm:$0xff]
        %v1117 = vld [vmem:[%s1085 + $0xbc] sm:$0xf]
        %v1118 = vld [vmem:[%s1085 + $0xc0] sm:$0xff]
        %v1119 = vld [vmem:[%s1085 + $0xc8] sm:$0xf]
        %v1120 = vld [vmem:[%s1085 + $0xcc] sm:$0xff]
        %v1121 = vld [vmem:[%s1085 + $0xd4] sm:$0xf]
        %v1122 = vld [vmem:[%s1085 + $0xd8] sm:$0xff]
        %v1123 = vld [vmem:[%s1085 + $0xe0] sm:$0xf]
        %v1124 = vld [vmem:[%s1085 + $0xe4] sm:$0xff]
        %v1125 = vld [vmem:[%s1085 + $0xec] sm:$0xf]
        %v1126 = vld [vmem:[%s1085 + $0xf0] sm:$0xff]
        %v1127 = vld [vmem:[%s1085 + $0xf8] sm:$0xf]
        %v1128 = vld [vmem:[%s1085 + $0xfc] sm:$0xff]
        %v1129 = vld [vmem:[%s1085 + $0x104] sm:$0xf]
        %v1130 = vld [vmem:[%s1085 + $0x108] sm:$0xff]
        %v1131 = vld [vmem:[%s1085 + $0x110] sm:$0xf]
        %v1132 = vld [vmem:[%s1085 + $0x114] sm:$0xff]
        %v1133 = vld [vmem:[%s1085 + $0x11c] sm:$0xf]
        %vm1134 = vcmask 1046528
        %v1135 = vrot.slane %v433, 1
        %v1136 = vrot.slane %v773, 1
        %v1137 = vsel %vm1134, %v1135, %v1136
        %v1138 = vrot.slane %v434, 1
        %v1139 = vrot.slane %v774, 1
        %v1140 = vsel %vm1134, %v1138, %v1139
        %v1190 = vunpack.c.l.b16 %v1086
        %v1191 = vunpack.c.h.b16 %v1086
        %v1192 = vunpack.c.l.b16 %v1087
        %v1193 = vunpack.c.l.b16 %v1088
        %v1194 = vunpack.c.h.b16 %v1088
        %v1195 = vunpack.c.l.b16 %v1089
        %v1196 = vunpack.c.l.b16 %v1090
        %v1197 = vunpack.c.h.b16 %v1090
        %v1198 = vunpack.c.l.b16 %v1091
        %v1199 = vunpack.c.l.b16 %v1092
        %v1200 = vunpack.c.h.b16 %v1092
        %v1201 = vunpack.c.l.b16 %v1093
        %v1202 = vunpack.c.l.b16 %v1094
        %v1203 = vunpack.c.h.b16 %v1094
        %v1204 = vunpack.c.l.b16 %v1095
        %v1205 = vunpack.c.l.b16 %v1096
        %v1206 = vunpack.c.h.b16 %v1096
        %v1207 = vunpack.c.l.b16 %v1097
        %v1208 = vunpack.c.l.b16 %v1098
        %v1209 = vunpack.c.h.b16 %v1098
        %v1210 = vunpack.c.l.b16 %v1099
        %v1211 = vunpack.c.l.b16 %v1100
        %v1212 = vunpack.c.h.b16 %v1100
        %v1213 = vunpack.c.l.b16 %v1101
        %v1214 = vunpack.c.l.b16 %v1102
        %v1215 = vunpack.c.h.b16 %v1102
        %v1216 = vunpack.c.l.b16 %v1103
        %v1217 = vunpack.c.l.b16 %v1104
        %v1218 = vunpack.c.h.b16 %v1104
        %v1219 = vunpack.c.l.b16 %v1105
        %v1220 = vunpack.c.l.b16 %v1106
        %v1221 = vunpack.c.h.b16 %v1106
        %v1222 = vunpack.c.l.b16 %v1107
        %v1223 = vunpack.c.l.b16 %v1108
        %v1224 = vunpack.c.h.b16 %v1108
        %v1225 = vunpack.c.l.b16 %v1109
        %v1226 = vunpack.c.l.b16 %v1110
        %v1227 = vunpack.c.h.b16 %v1110
        %v1228 = vunpack.c.l.b16 %v1111
        %v1229 = vunpack.c.l.b16 %v1112
        %v1230 = vunpack.c.h.b16 %v1112
        %v1231 = vunpack.c.l.b16 %v1113
        %v1232 = vunpack.c.l.b16 %v1114
        %v1233 = vunpack.c.h.b16 %v1114
        %v1234 = vunpack.c.l.b16 %v1115
        %v1235 = vunpack.c.l.b16 %v1116
        %v1236 = vunpack.c.h.b16 %v1116
        %v1237 = vunpack.c.l.b16 %v1117
        %v1238 = vunpack.c.l.b16 %v1118
        %v1239 = vunpack.c.h.b16 %v1118
        %v1240 = vunpack.c.l.b16 %v1119
        %v1241 = vunpack.c.l.b16 %v1120
        %v1242 = vunpack.c.h.b16 %v1120
        %v1243 = vunpack.c.l.b16 %v1121
        %v1244 = vunpack.c.l.b16 %v1122
        %v1245 = vunpack.c.h.b16 %v1122
        %v1246 = vunpack.c.l.b16 %v1123
        %v1247 = vunpack.c.l.b16 %v1124
        %v1248 = vunpack.c.h.b16 %v1124
        %v1249 = vunpack.c.l.b16 %v1125
        %v1250 = vunpack.c.l.b16 %v1126
        %v1251 = vunpack.c.h.b16 %v1126
        %v1252 = vunpack.c.l.b16 %v1127
        %v1253 = vunpack.c.l.b16 %v1128
        %v1254 = vunpack.c.h.b16 %v1128
        %v1255 = vunpack.c.l.b16 %v1129
        %v1256 = vunpack.c.l.b16 %v1130
        %v1257 = vunpack.c.h.b16 %v1130
        %v1258 = vunpack.c.l.b16 %v1131
        %v1259 = vunpack.c.l.b16 %v1132
        %v1260 = vunpack.c.h.b16 %v1132
        %v1261 = vunpack.c.l.b16 %v1133
        %v1262 = vpack.c.b16 %v1193, %v1190
        %v1263 = vpack.c.b16 %v1194, %v1191
        %v1264 = vpack.c.b16 %v1195, %v1192
        %v1265 = vpack.c.b16 %v1199, %v1196
        %v1266 = vpack.c.b16 %v1200, %v1197
        %v1267 = vpack.c.b16 %v1201, %v1198
        %v1268 = vpack.c.b16 %v1205, %v1202
        %v1269 = vpack.c.b16 %v1206, %v1203
        %v1270 = vpack.c.b16 %v1207, %v1204
        %v1271 = vpack.c.b16 %v1211, %v1208
        %v1272 = vpack.c.b16 %v1212, %v1209
        %v1273 = vpack.c.b16 %v1213, %v1210
        %v1274 = vpack.c.b16 %v1217, %v1214
        %v1275 = vpack.c.b16 %v1218, %v1215
        %v1276 = vpack.c.b16 %v1219, %v1216
        %v1277 = vpack.c.b16 %v1223, %v1220
        %v1278 = vpack.c.b16 %v1224, %v1221
        %v1279 = vpack.c.b16 %v1225, %v1222
        %v1280 = vpack.c.b16 %v1229, %v1226
        %v1281 = vpack.c.b16 %v1230, %v1227
        %v1282 = vpack.c.b16 %v1231, %v1228
        %v1283 = vpack.c.b16 %v1235, %v1232
        %v1284 = vpack.c.b16 %v1236, %v1233
        %v1285 = vpack.c.b16 %v1237, %v1234
        %v1286 = vpack.c.b16 %v1241, %v1238
        %v1287 = vpack.c.b16 %v1242, %v1239
        %v1288 = vpack.c.b16 %v1243, %v1240
        %v1289 = vpack.c.b16 %v1247, %v1244
        %v1290 = vpack.c.b16 %v1248, %v1245
        %v1291 = vpack.c.b16 %v1249, %v1246
        %v1292 = vpack.c.b16 %v1253, %v1250
        %v1293 = vpack.c.b16 %v1254, %v1251
        %v1294 = vpack.c.b16 %v1255, %v1252
        %v1295 = vpack.c.b16 %v1259, %v1256
        %v1296 = vpack.c.b16 %v1260, %v1257
        %v1297 = vpack.c.b16 %v1261, %v1258
        %v1335 = vsel %vm358, %v1140, 0
        %1337 = vmatpush.bf16.msra.mxu0 %v1283
        %1338 = vmatpush.bf16.msra.mxu0 %v1280
        %1339 = vmatpush.bf16.msra.mxu0 %v1277
        %1340 = vmatpush.bf16.msra.mxu0 %v1274
        %1341 = vmatpush.bf16.msra.mxu0 %v1271
        %1342 = vmatpush.bf16.msra.mxu0 %v1268
        %1343 = vmatpush.bf16.msra.mxu0 %v1265
        %1344 = vmatpush.bf16.msra.mxu0 %v1262
        %1345 = vmatmul.bf16.gmra.mxu0 %v1137
        %v1346 = vpop.f32.mrf.mxu0
        %v1347 = vadd.f32 0.0, %v1346
        %v1348 = vpop.f32.mrf.mxu0
        %v1349 = vadd.f32 0.0, %v1348
        %1350 = vdwg.mxu0
        %1351 = vmatpush.bf16.msra.mxu0 0
        %1352 = vmatpush.bf16.msra.mxu0 0
        %1353 = vmatpush.bf16.msra.mxu0 0
        %1354 = vmatpush.bf16.msra.mxu0 0
        %1355 = vmatpush.bf16.msra.mxu0 %v1295
        %1356 = vmatpush.bf16.msra.mxu0 %v1292
        %1357 = vmatpush.bf16.msra.mxu0 %v1289
        %1358 = vmatpush.bf16.msra.mxu0 %v1286
        %1359 = vmatmul.bf16.gmra.mxu0 %v1335
        %v1360 = vpop.f32.mrf.mxu0
        %v1361 = vadd.f32 %v1347, %v1360
        %v1362 = vpop.f32.mrf.mxu0
        %v1363 = vadd.f32 %v1349, %v1362
        %1364 = vdwg.mxu0
        %1365 = vmatpush.bf16.msra.mxu0 %v1284
        %1366 = vmatpush.bf16.msra.mxu0 %v1281
        %1367 = vmatpush.bf16.msra.mxu0 %v1278
        %1368 = vmatpush.bf16.msra.mxu0 %v1275
        %1369 = vmatpush.bf16.msra.mxu0 %v1272
        %1370 = vmatpush.bf16.msra.mxu0 %v1269
        %1371 = vmatpush.bf16.msra.mxu0 %v1266
        %1372 = vmatpush.bf16.msra.mxu0 %v1263
        %1373 = vmatmul.bf16.gmra.mxu0 %v1137
        %v1374 = vpop.f32.mrf.mxu0
        %v1375 = vadd.f32 0.0, %v1374
        %v1376 = vpop.f32.mrf.mxu0
        %v1377 = vadd.f32 0.0, %v1376
        %1378 = vdwg.mxu0
        %1379 = vmatpush.bf16.msra.mxu0 0
        %1380 = vmatpush.bf16.msra.mxu0 0
        %1381 = vmatpush.bf16.msra.mxu0 0
        %1382 = vmatpush.bf16.msra.mxu0 0
        %1383 = vmatpush.bf16.msra.mxu0 %v1296
        %1384 = vmatpush.bf16.msra.mxu0 %v1293
        %1385 = vmatpush.bf16.msra.mxu0 %v1290
        %1386 = vmatpush.bf16.msra.mxu0 %v1287
        %1387 = vmatmul.bf16.gmra.mxu0 %v1335
        %v1388 = vpop.f32.mrf.mxu0
        %v1389 = vadd.f32 %v1375, %v1388
        %v1390 = vpop.f32.mrf.mxu0
        %v1391 = vadd.f32 %v1377, %v1390
        %1392 = vdwg.mxu0
        %1393 = vmatpush.bf16.msra.mxu0 %v1285
        %1394 = vmatpush.bf16.msra.mxu0 %v1282
        %1395 = vmatpush.bf16.msra.mxu0 %v1279
        %1396 = vmatpush.bf16.msra.mxu0 %v1276
        %1397 = vmatpush.bf16.msra.mxu0 %v1273
        %1398 = vmatpush.bf16.msra.mxu0 %v1270
        %1399 = vmatpush.bf16.msra.mxu0 %v1267
        %1400 = vmatpush.bf16.msra.mxu0 %v1264
        %1401 = vmatmul.bf16.gmra.mxu0 %v1137
        %v1402 = vpop.f32.mrf.mxu0
        %v1403 = vadd.f32 0.0, %v1402
        %v1404 = vpop.f32.mrf.mxu0
        %v1405 = vadd.f32 0.0, %v1404
        %1406 = vdwg.mxu0
        %1407 = vmatpush.bf16.msra.mxu0 0
        %1408 = vmatpush.bf16.msra.mxu0 0
        %1409 = vmatpush.bf16.msra.mxu0 0
        %1410 = vmatpush.bf16.msra.mxu0 0
        %1411 = vmatpush.bf16.msra.mxu0 %v1297
        %1412 = vmatpush.bf16.msra.mxu0 %v1294
        %1413 = vmatpush.bf16.msra.mxu0 %v1291
        %1414 = vmatpush.bf16.msra.mxu0 %v1288
        %1415 = vmatmul.bf16.gmra.mxu0 %v1335
        %v1416 = vpop.f32.mrf.mxu0
        %v1417 = vadd.f32 %v1403, %v1416
        %v1418 = vpop.f32.mrf.mxu0
        %v1419 = vadd.f32 %v1405, %v1418
        %1420 = vdwg.mxu0
        %v1421 = vadd.f32 %v1079, %v1361
        %v1422 = vadd.f32 %v1080, %v1389
        %v1423 = vadd.f32 %v1081, %v1417
        %v1424 = vadd.f32 %v1082, %v1363
        %v1425 = vadd.f32 %v1083, %v1391
        %v1426 = vadd.f32 %v1084, %v1419
        %v1427 = vxor.u32 %v1421, 2147483648
        %v1428 = vxor.u32 %v1424, 2147483648
        %v1429 = vmul.f32 %v1427, 1.442695
        %v1430 = vpow.pop %v1429
        %v1431 = vmul.f32 %v1428, 1.442695
        %v1432 = vpow.pop %v1431
        %v1433 = vadd.f32 %v1430, 1.0
        %v1434 = vadd.f32 %v1432, 1.0
        %v1435 = vrcp.pop %v1433
        %v1436 = vmul.f32 %v1433, %v1435
        %v1437 = vsub.f32 1.0, %v1436
        %v1438 = vmul.f32 %v1435, %v1437
        %v1439 = vadd.f32 %v1435, %v1438
        %vm1440 = vweird.f32 %v1433
        %vm1441 = vweird.f32 %v1435
        %vm1442 = vmor %vm1440, %vm1441
        %v1443 = vsel %vm1442, %v1435, %v1439
        %v1444 = vand.u32 2147483647, %v1433
        %vm1445 = vcmp.eq.f32.partialorder %v1444, 8.507059e+37
        %v1446 = vand.u32 %v1433, 2147483648
        %v1447 = vor.u32 1.1754944e-38, %v1446
        %v1448 = vsel %vm1445, %v1447, %v1443
        %v1449 = vmul.f32 1.0, %v1448
        %v1450 = vrcp.pop %v1434
        %v1451 = vmul.f32 %v1434, %v1450
        %v1452 = vsub.f32 1.0, %v1451
        %v1453 = vmul.f32 %v1450, %v1452
        %v1454 = vadd.f32 %v1450, %v1453
        %vm1455 = vweird.f32 %v1434
        %vm1456 = vweird.f32 %v1450
        %vm1457 = vmor %vm1455, %vm1456
        %v1458 = vsel %vm1457, %v1450, %v1454
        %v1459 = vand.u32 2147483647, %v1434
        %vm1460 = vcmp.eq.f32.partialorder %v1459, 8.507059e+37
        %v1461 = vand.u32 %v1434, 2147483648
        %v1462 = vor.u32 1.1754944e-38, %v1461
        %v1463 = vsel %vm1460, %v1462, %v1458
        %v1464 = vmul.f32 1.0, %v1463
        %v1465 = vxor.u32 %v1422, 2147483648
        %v1466 = vxor.u32 %v1425, 2147483648
        %v1467 = vmul.f32 %v1465, 1.442695
        %v1468 = vpow.pop %v1467
        %v1469 = vmul.f32 %v1466, 1.442695
        %v1470 = vpow.pop %v1469
        %v1471 = vadd.f32 %v1468, 1.0
        %v1472 = vadd.f32 %v1470, 1.0
        %v1473 = vrcp.pop %v1471
        %v1474 = vmul.f32 %v1471, %v1473
        %v1475 = vsub.f32 1.0, %v1474
        %v1476 = vmul.f32 %v1473, %v1475
        %v1477 = vadd.f32 %v1473, %v1476
        %vm1478 = vweird.f32 %v1471
        %vm1479 = vweird.f32 %v1473
        %vm1480 = vmor %vm1478, %vm1479
        %v1481 = vsel %vm1480, %v1473, %v1477
        %v1482 = vand.u32 2147483647, %v1471
        %vm1483 = vcmp.eq.f32.partialorder %v1482, 8.507059e+37
        %v1484 = vand.u32 %v1471, 2147483648
        %v1485 = vor.u32 1.1754944e-38, %v1484
        %v1486 = vsel %vm1483, %v1485, %v1481
        %v1487 = vmul.f32 1.0, %v1486
        %v1488 = vrcp.pop %v1472
        %v1489 = vmul.f32 %v1472, %v1488
        %v1490 = vsub.f32 1.0, %v1489
        %v1491 = vmul.f32 %v1488, %v1490
        %v1492 = vadd.f32 %v1488, %v1491
        %vm1493 = vweird.f32 %v1472
        %vm1494 = vweird.f32 %v1488
        %vm1495 = vmor %vm1493, %vm1494
        %v1496 = vsel %vm1495, %v1488, %v1492
        %v1497 = vand.u32 2147483647, %v1472
        %vm1498 = vcmp.eq.f32.partialorder %v1497, 8.507059e+37
        %v1499 = vand.u32 %v1472, 2147483648
        %v1500 = vor.u32 1.1754944e-38, %v1499
        %v1501 = vsel %vm1498, %v1500, %v1496
        %v1502 = vmul.f32 1.0, %v1501
        %v1503 = vmul.f32 %v332, %v1449
        %v1504 = vmul.f32 %v333, %v1464
        %1505 = vst [vmem:[#allocation3 + $0x1] sm:$0xff] %v1503
        %1506 = vst [vmem:[#allocation3 + $0x9] sm:$0xff] %v1504
        %v1507 = vld [vmem:[#allocation3] sm:$0xff]
        %v1508 = vld [vmem:[#allocation3 + $0x8] sm:$0xff]
        %v1509 = vld [vmem:[#allocation3 + $0x10] sm:$0x3]
        %v1510 = vpack.c.bf16 %v1507, %v1507
        %v1511 = vpack.c.bf16 %v1508, %v1508
        %v1512 = vpack.c.bf16 %v1509, %v1509
        %v1513 = vld [vmem:[#allocation10] sm:$0xf]
        %v1514 = vld [vmem:[#allocation10 + $0x4] sm:$0xf]
        %v1515 = vld [vmem:[#allocation10 + $0x8] sm:$0xf]
        %v1516 = vld [vmem:[#allocation10 + $0xc] sm:$0xf]
        %v1517 = vld [vmem:[#allocation10 + $0x10] sm:$0xf]
        %v1518 = vld [vmem:[#allocation10 + $0x14] sm:$0xf]
        %v1519 = vld [vmem:[#allocation10 + $0x18] sm:$0xf]
        %v1520 = vld [vmem:[#allocation10 + $0x1c] sm:$0xf]
        %v1521 = vld [vmem:[#allocation10 + $0x20] sm:$0xf]
        %v1522 = vld [vmem:[#allocation10 + $0x24] sm:$0xf]
        %v1523 = vld [vmem:[#allocation10 + $0x28] sm:$0xf]
        %v1524 = vld [vmem:[#allocation10 + $0x2c] sm:$0xf]
        %v1525 = vld [vmem:[#allocation10 + $0x30] sm:$0xf]
        %v1526 = vld [vmem:[#allocation10 + $0x34] sm:$0xf]
        %v1527 = vld [vmem:[#allocation10 + $0x38] sm:$0xf]
        %v1528 = vld [vmem:[#allocation10 + $0x3c] sm:$0xf]
        %s1529 = scalar_lea.vmem [#allocation10], 64
        %v1530 = vld [vmem:[%s1529] sm:$0xf]
        %v1531 = vld [vmem:[%s1529 + $0x4] sm:$0xf]
        %v1532 = vld [vmem:[%s1529 + $0x8] sm:$0xf]
        %v1533 = vld [vmem:[%s1529 + $0xc] sm:$0xf]
        %v1534 = vld [vmem:[%s1529 + $0x10] sm:$0xf]
        %v1535 = vld [vmem:[%s1529 + $0x14] sm:$0xf]
        %v1536 = vld [vmem:[%s1529 + $0x18] sm:$0xf]
        %v1537 = vld [vmem:[%s1529 + $0x1c] sm:$0xf]
        %v1538 = vld [vmem:[%s1529 + $0x20] sm:$0xf]
        %v1539 = vld [vmem:[%s1529 + $0x24] sm:$0xf]
        %v1540 = vld [vmem:[%s1529 + $0x28] sm:$0xf]
        %v1541 = vld [vmem:[%s1529 + $0x2c] sm:$0xf]
        %v1542 = vld [vmem:[%s1529 + $0x30] sm:$0xf]
        %v1543 = vld [vmem:[%s1529 + $0x34] sm:$0xf]
        %v1544 = vld [vmem:[%s1529 + $0x38] sm:$0xf]
        %v1545 = vld [vmem:[%s1529 + $0x3c] sm:$0xf]
        %v1549 = vunpack.c.l.b16 %v1510
        %v1550 = vunpack.c.l.b16 %v1511
        %v1551 = vunpack.c.l.b16 %v1512
        %v1552 = vpack.c.b16 %v1550, %v1549
        %v1553 = vpack.c.b16 %v1551, %v1551
        %v1555 = vshrl.u32 %v1552, 16
        %v1557 = vshll.u32 %v1552, 16
        %v1559 = vrot.slane %v1557, 1
        %v1560 = vor.u32 %v1555, %v1559
        %v1562 = vshll.u32 %v1553, 16
        %v1564 = vrot.slane %v1562, 1
        %v1565 = vsel %vm775, %v1560, %v1564
        %v1583 = vunpack.c.l.b16 %v1530
        %v1584 = vunpack.c.l.b16 %v1531
        %v1585 = vunpack.c.l.b16 %v1532
        %v1586 = vunpack.c.l.b16 %v1533
        %v1587 = vunpack.c.l.b16 %v1534
        %v1588 = vunpack.c.l.b16 %v1535
        %v1589 = vunpack.c.l.b16 %v1536
        %v1590 = vunpack.c.l.b16 %v1537
        %v1591 = vunpack.c.l.b16 %v1538
        %v1592 = vunpack.c.l.b16 %v1539
        %v1593 = vunpack.c.l.b16 %v1540
        %v1594 = vunpack.c.l.b16 %v1541
        %v1595 = vunpack.c.l.b16 %v1542
        %v1596 = vunpack.c.l.b16 %v1543
        %v1597 = vunpack.c.l.b16 %v1544
        %v1598 = vunpack.c.l.b16 %v1545
        %v1599 = vpack.c.b16 %v1584, %v1583
        %v1600 = vpack.c.b16 %v1586, %v1585
        %v1601 = vpack.c.b16 %v1588, %v1587
        %v1602 = vpack.c.b16 %v1590, %v1589
        %v1603 = vpack.c.b16 %v1592, %v1591
        %v1604 = vpack.c.b16 %v1594, %v1593
        %v1605 = vpack.c.b16 %v1596, %v1595
        %v1606 = vpack.c.b16 %v1598, %v1597
        %1615 = vmatpush.bf16.msra.mxu0 %v1606
        %1616 = vmatpush.bf16.msra.mxu0 %v1605
        %1617 = vmatpush.bf16.msra.mxu0 %v1604
        %1618 = vmatpush.bf16.msra.mxu0 %v1603
        %1619 = vmatpush.bf16.msra.mxu0 %v1602
        %1620 = vmatpush.bf16.msra.mxu0 %v1601
        %1621 = vmatpush.bf16.msra.mxu0 %v1600
        %1622 = vmatpush.bf16.msra.mxu0 %v1599
        %1623 = vmatmul.bf16.gmra.mxu0 %v1565
        %v1624 = vpop.f32.mrf.mxu0
        %v1625 = vadd.f32 0.0, %v1624
        %v1626 = vpop.f32.mrf.mxu0
        %v1627 = vadd.f32 0.0, %v1626
        %1628 = vdwg.mxu0
        %v1646 = vunpack.c.l.b16 %v1513
        %v1647 = vunpack.c.l.b16 %v1514
        %v1648 = vunpack.c.l.b16 %v1515
        %v1649 = vunpack.c.l.b16 %v1516
        %v1650 = vunpack.c.l.b16 %v1517
        %v1651 = vunpack.c.l.b16 %v1518
        %v1652 = vunpack.c.l.b16 %v1519
        %v1653 = vunpack.c.l.b16 %v1520
        %v1654 = vunpack.c.l.b16 %v1521
        %v1655 = vunpack.c.l.b16 %v1522
        %v1656 = vunpack.c.l.b16 %v1523
        %v1657 = vunpack.c.l.b16 %v1524
        %v1658 = vunpack.c.l.b16 %v1525
        %v1659 = vunpack.c.l.b16 %v1526
        %v1660 = vunpack.c.l.b16 %v1527
        %v1661 = vunpack.c.l.b16 %v1528
        %v1662 = vpack.c.b16 %v1647, %v1646
        %v1663 = vpack.c.b16 %v1649, %v1648
        %v1664 = vpack.c.b16 %v1651, %v1650
        %v1665 = vpack.c.b16 %v1653, %v1652
        %v1666 = vpack.c.b16 %v1655, %v1654
        %v1667 = vpack.c.b16 %v1657, %v1656
        %v1668 = vpack.c.b16 %v1659, %v1658
        %v1669 = vpack.c.b16 %v1661, %v1660
        %1678 = vmatpush.bf16.msra.mxu0 %v1669
        %1679 = vmatpush.bf16.msra.mxu0 %v1668
        %1680 = vmatpush.bf16.msra.mxu0 %v1667
        %1681 = vmatpush.bf16.msra.mxu0 %v1666
        %1682 = vmatpush.bf16.msra.mxu0 %v1665
        %1683 = vmatpush.bf16.msra.mxu0 %v1664
        %1684 = vmatpush.bf16.msra.mxu0 %v1663
        %1685 = vmatpush.bf16.msra.mxu0 %v1662
        %1686 = vmatmul.bf16.gmra.mxu0 %v1552
        %v1687 = vpop.f32.mrf.mxu0
        %v1688 = vadd.f32 %v1625, %v1687
        %v1689 = vpop.f32.mrf.mxu0
        %v1690 = vadd.f32 %v1627, %v1689
        %1691 = vdwg.mxu0
        %s1692 = scalar_lea.vmem [#allocation10], 128
        %v1693 = vld [vmem:[%s1692] sm:$0xf]
        %v1694 = vld [vmem:[%s1692 + $0x4] sm:$0xf]
        %v1695 = vld [vmem:[%s1692 + $0x8] sm:$0xf]
        %v1696 = vld [vmem:[%s1692 + $0xc] sm:$0xf]
        %v1697 = vld [vmem:[%s1692 + $0x10] sm:$0xf]
        %v1698 = vld [vmem:[%s1692 + $0x14] sm:$0xf]
        %v1699 = vld [vmem:[%s1692 + $0x18] sm:$0xf]
        %v1700 = vld [vmem:[%s1692 + $0x1c] sm:$0xf]
        %v1701 = vld [vmem:[%s1692 + $0x20] sm:$0xf]
        %v1702 = vld [vmem:[%s1692 + $0x24] sm:$0xf]
        %v1703 = vld [vmem:[%s1692 + $0x28] sm:$0xf]
        %v1704 = vld [vmem:[%s1692 + $0x2c] sm:$0xf]
        %v1705 = vld [vmem:[%s1692 + $0x30] sm:$0xf]
        %v1706 = vld [vmem:[%s1692 + $0x34] sm:$0xf]
        %v1707 = vld [vmem:[%s1692 + $0x38] sm:$0xf]
        %v1708 = vld [vmem:[%s1692 + $0x3c] sm:$0xf]
        %v1709 = vrot.slane %v1552, 1
        %v1710 = vrot.slane %v1553, 1
        %v1711 = vsel %vm1134, %v1709, %v1710
        %v1729 = vunpack.c.l.b16 %v1693
        %v1730 = vunpack.c.l.b16 %v1694
        %v1731 = vunpack.c.l.b16 %v1695
        %v1732 = vunpack.c.l.b16 %v1696
        %v1733 = vunpack.c.l.b16 %v1697
        %v1734 = vunpack.c.l.b16 %v1698
        %v1735 = vunpack.c.l.b16 %v1699
        %v1736 = vunpack.c.l.b16 %v1700
        %v1737 = vunpack.c.l.b16 %v1701
        %v1738 = vunpack.c.l.b16 %v1702
        %v1739 = vunpack.c.l.b16 %v1703
        %v1740 = vunpack.c.l.b16 %v1704
        %v1741 = vunpack.c.l.b16 %v1705
        %v1742 = vunpack.c.l.b16 %v1706
        %v1743 = vunpack.c.l.b16 %v1707
        %v1744 = vunpack.c.l.b16 %v1708
        %v1745 = vpack.c.b16 %v1730, %v1729
        %v1746 = vpack.c.b16 %v1732, %v1731
        %v1747 = vpack.c.b16 %v1734, %v1733
        %v1748 = vpack.c.b16 %v1736, %v1735
        %v1749 = vpack.c.b16 %v1738, %v1737
        %v1750 = vpack.c.b16 %v1740, %v1739
        %v1751 = vpack.c.b16 %v1742, %v1741
        %v1752 = vpack.c.b16 %v1744, %v1743
        %1761 = vmatpush.bf16.msra.mxu0 %v1752
        %1762 = vmatpush.bf16.msra.mxu0 %v1751
        %1763 = vmatpush.bf16.msra.mxu0 %v1750
        %1764 = vmatpush.bf16.msra.mxu0 %v1749
        %1765 = vmatpush.bf16.msra.mxu0 %v1748
        %1766 = vmatpush.bf16.msra.mxu0 %v1747
        %1767 = vmatpush.bf16.msra.mxu0 %v1746
        %1768 = vmatpush.bf16.msra.mxu0 %v1745
        %1769 = vmatmul.bf16.gmra.mxu0 %v1711
        %v1770 = vpop.f32.mrf.mxu0
        %v1771 = vadd.f32 0.0, %v1770
        %v1772 = vpop.f32.mrf.mxu0
        %v1773 = vadd.f32 0.0, %v1772
        %1774 = vdwg.mxu0
        %v1775 = vadd.f32 %v1688, %v1771
        %v1776 = vadd.f32 %v1690, %v1773
        %v1777 = vadd.f32 %v1423, %v1775
        %v1778 = vadd.f32 %v1426, %v1776
        %v1779 = vtanh.pop %v1777
        %v1780 = vtanh.pop %v1778
        %v1781 = vsub.f32 1.0, %v1487
        %v1782 = vsub.f32 1.0, %v1502
        %v1783 = vmul.f32 %v332, %v1781
        %v1784 = vmul.f32 %v333, %v1782
        %v1785 = vmul.f32 %v1779, %v1487
        %v1786 = vmul.f32 %v1780, %v1502
        %v1787 = vadd.f32 %v1783, %v1785
        %v1788 = vadd.f32 %v1784, %v1786
        %1789 = vst [vmem:[%s319] sm:$0xff] %v1787
        %1790 = vst [vmem:[%s319 + $0x8] sm:$0xff] %v1788
        %s1791 = sand.u32 %s149, 1
        %s1792 = scalar_lea.sflag [#allocation6], %s1791
        %s1793 = sand.u32 %s149, 1
        %s1794 = smul.addr %s1793, 16
        %s1795 = scalar_lea.vmem [#allocation12], %s1794
        // Predicated region
        $region57: #{tpu_custom_call.1} parent=39 // pred_check
          %p1796 = pneg %p159
        $region58: #{tpu_custom_call.1} parent=39 // pred_check_branch
          %1798 = sbr.rel (%p1796) target = $region60
        $region59: #{tpu_custom_call.1} parent=39 // pred_region
          %1800 = vsyncadd %s1792, 0
          %s1801 = smul.addr %s26, 2
          %s1802 = smul.addr %s1801, 8
          %s1803 = scalar_lea.hbm %s5, %s1802
          %s1804 = sshll.u32 %s1795, 4
          %s1805 = int_to_ptr.vmem [resolvable:$true] %s1804
          %s1806 = sshll.u32 %s1803, 4
          %s1807 = int_to_ptr.hbm [resolvable:$true] %s1806
          %1812 = dma.vmem_to_hbm [thread:$0]  %s1805, 256, %s1807, %s1792, 128, 128, 8
        $region60: #{tpu_custom_call.1} parent=39 // pred_fallthru
          _
      $region40: #{tpu_custom_call.1} parent=5 // pred_fallthru
        _
      %p1813 = scmp.le.s32.totalorder 2, %s21
      // Predicated region
      $region61: #{tpu_custom_call.1} parent=5 // pred_check
        %p1814 = pneg %p1813
      $region62: #{tpu_custom_call.1} parent=5 // pred_check_branch
        %1816 = sbr.rel (%p1814) target = $region64
      $region63: #{tpu_custom_call.1} parent=5 // pred_region
        %s1817 = ssub.s32 %s21, 2
        // Predicated region
        $region65: #{tpu_custom_call.1} parent=63 // pred_check
          %p1818 = pneg %p165
        $region66: #{tpu_custom_call.1} parent=63 // pred_check_branch
          %1820 = sbr.rel (%p1818) target = $region68
        $region67: #{tpu_custom_call.1} parent=63 // pred_region
          %s1821 = sand.u32 %s150, 1
          %s1822 = scalar_lea.sflag [#allocation6], %s1821
          %s1823 = sand.u32 %s150, 1
          %s1824 = smul.addr %s1823, 16
          %s1825 = scalar_lea.vmem [#allocation12], %s1824
          %1827 = dma.done %s1822, 256
        $region68: #{tpu_custom_call.1} parent=63 // pred_fallthru
          _
      $region64: #{tpu_custom_call.1} parent=5 // pred_fallthru
        _
    $region6: #{tpu_custom_call.1} parent=1 // loop_footer
      %s25 = sadd.s32 1, %s21
    $region7: #{tpu_custom_call.1} parent=1 // loop_footer_branch
      %20 = sbr.rel target = $region3
    $region8: #{tpu_custom_call.1} parent=1 // loop_exit
      _
    %1828 = vsyncpa [#allocation5], 1
    %s1829 = scalar_lea.sflag [#allocation5], 1
    %1830 = vsyncpa %s1829, 1
    %1831 = vsyncpa [#allocation8], 1
    %s1832 = scalar_lea.sflag [#allocation8], 1
    %1833 = vsyncpa %s1832, 1
    %1834 = vsyncpa [#allocation11], 1
    %1835 = vsyncpa [#allocation6], 1
    %s1836 = scalar_lea.sflag [#allocation6], 1
    %1837 = vsyncpa %s1836, 1

</llo_original>
